<compile_context>
chip_gen: v5e
topology: v5e:2x2
jax: 0.10.0
libtpu: 0.0.40
codegen_flags: <defaults>
</compile_context>

<pallas_src>
import math
from functools import partial

import jax
import jax.numpy as jnp
from jax.experimental import pallas as pl
from jax.experimental.pallas import tpu as pltpu


# ------------------------------ Pallas kernel -------------------------------

def _sigmoid(z):
    # explicit form (exp + divide) -> EUP / VPU, guaranteed Mosaic lowering
    return 1.0 / (1.0 + jnp.exp(-z))


def _short_term_kernel(x_ref, ci_ref, other_ref,
                       wih_ref, whh_ref, blstm_ref,
                       wq_ref, wk_ref, wv_ref, wfc_ref,
                       o_ref, lstm_scratch,
                       *, n_heads, d_k, d_v):
    """One batch element:  LSTM -> MultiHeadAttention -> lstm_out * exp(-center_out)."""
    x = x_ref[0]            # [T, 4*d_model]   LSTM input (pre-concatenated)
    ci = ci_ref[0]          # [L, 2*d_model]   center_input (K/V source)
    other = other_ref[0]    # [T, L]           additive attention bias 1/(1+dt)

    T = x.shape[0]
    H = whh_ref.shape[0]    # hidden = 2*d_model

    # ------------------------- LSTM (zero init state) -----------------------
    # Hoist the input-side gate projection out of the time loop: one MXU pass.
    xg = jnp.dot(x, wih_ref[...], preferred_element_type=jnp.float32) + blstm_ref[...]  # [T, 4H]
    whh = whh_ref[...]                                                                   # [H, 4H]

    h = jnp.zeros((1, H), jnp.float32)
    c = jnp.zeros((1, H), jnp.float32)
    for t in range(T):  # T is small & static -> fully unrolled recurrence
        g = xg[t:t + 1, :] + jnp.dot(h, whh, preferred_element_type=jnp.float32)  # [1, 4H]
        i_g = _sigmoid(g[:, 0 * H:1 * H])
        f_g = _sigmoid(g[:, 1 * H:2 * H])
        g_g = jnp.tanh(g[:, 2 * H:3 * H])
        o_g = _sigmoid(g[:, 3 * H:4 * H])
        c = f_g * c + i_g * g_g
        h = o_g * jnp.tanh(c)
        lstm_scratch[t:t + 1, :] = h
    lstm_out = lstm_scratch[...]                                  # [T, H]  (VMEM resident)

    # -------- MultiHeadAttention: Q = lstm_out, K = V = center_input --------
    q = jnp.dot(lstm_out, wq_ref[...], preferred_element_type=jnp.float32)   # [T, n_heads*d_k]
    k = jnp.dot(ci, wk_ref[...], preferred_element_type=jnp.float32)         # [L, n_heads*d_k]
    v = jnp.dot(ci, wv_ref[...], preferred_element_type=jnp.float32)         # [L, n_heads*d_v]

    inv_sqrt_dk = 1.0 / math.sqrt(d_k)
    ctxs = []
    for hd in range(n_heads):
        qh = q[:, hd * d_k:(hd + 1) * d_k]                                    # [T, d_k]
        kh = k[:, hd * d_k:(hd + 1) * d_k]                                    # [L, d_k]
        vh = v[:, hd * d_v:(hd + 1) * d_v]                                    # [L, d_v]
        s = jax.lax.dot_general(qh, kh, (((1,), (1,)), ((), ())),
                                preferred_element_type=jnp.float32) * inv_sqrt_dk
        s = s + other                                                         # [T, L]
        s = s - jnp.max(s, axis=-1, keepdims=True)                            # stable softmax
        p = jnp.exp(s)
        p = p / jnp.sum(p, axis=-1, keepdims=True)
        ctxs.append(jnp.dot(p, vh, preferred_element_type=jnp.float32))       # [T, d_v]
    context = jnp.concatenate(ctxs, axis=-1)                                  # [T, n_heads*d_v]
    center_out = jnp.dot(context, wfc_ref[...],
                         preferred_element_type=jnp.float32)                  # [T, H]

    # out = lstm_output * exp(-center_out)   (dropout1/dropout2 identity in eval)
    o_ref[0] = lstm_out * jnp.exp(-center_out)


# --------------------------------- wrapper ----------------------------------

def short_term_encoder(params, user_emb, traj_emb, geo_emb,
                       center_traj_emb, long_traj_emb, user_perfence, dt,
                       *, n_heads=4, d_k=64, d_v=64):
    B, T, d = traj_emb.shape
    L = long_traj_emb.shape[1]
    H = 2 * d                       # LSTM hidden / attention d_model

    # ---- glue (layout + tiny elementwise) in plain JAX ----
    up = jnp.broadcast_to(user_perfence, (B, T, user_perfence.shape[-1]))     # repeat seq
    x_in = jnp.concatenate([traj_emb, geo_emb, user_emb, up], axis=-1)        # [B, T, 4d]

    ew = jnp.exp(params["w"])
    w1 = ew[0] / jnp.sum(ew)
    w2 = ew[1] / jnp.sum(ew)
    ci = jax.nn.relu(w1 * long_traj_emb + w2 * center_traj_emb)               # [B, L, d]
    ci = jnp.concatenate([ci, jnp.tile(user_emb, (1, L // T, 1))], axis=-1)   # [B, L, 2d]

    other = 1.0 / (1.0 + dt)                                                  # [B, T, L]

    # weights in kernel-facing ([in, out]) layout; LSTM biases folded together
    wih_t = params["w_ih"].T                                                  # [4d, 4H]
    whh_t = params["w_hh"].T                                                  # [H,  4H]
    b_lstm = (params["b_ih"] + params["b_hh"]).reshape(1, 4 * H)
    wq_t = params["w_q"].T                                                    # [H, n_heads*d_k]
    wk_t = params["w_k"].T
    wv_t = params["w_v"].T
    wfc_t = params["w_fc"].T                                                  # [n_heads*d_v, H]

    kernel = partial(_short_term_kernel, n_heads=n_heads, d_k=d_k, d_v=d_v)
    return pl.pallas_call(
        kernel,
        out_shape=jax.ShapeDtypeStruct((B, T, H), jnp.float32),
        grid=(B,),
        in_specs=[
            pl.BlockSpec((1, T, 4 * d), lambda b: (b, 0, 0)),     # x_in
            pl.BlockSpec((1, L, H), lambda b: (b, 0, 0)),         # center_input
            pl.BlockSpec((1, T, L), lambda b: (b, 0, 0)),         # other
            pl.BlockSpec((4 * d, 4 * H), lambda b: (0, 0)),       # W_ih^T (resident)
            pl.BlockSpec((H, 4 * H), lambda b: (0, 0)),           # W_hh^T
            pl.BlockSpec((1, 4 * H), lambda b: (0, 0)),           # b_ih + b_hh
            pl.BlockSpec((H, n_heads * d_k), lambda b: (0, 0)),   # W_Q^T
            pl.BlockSpec((H, n_heads * d_k), lambda b: (0, 0)),   # W_K^T
            pl.BlockSpec((H, n_heads * d_v), lambda b: (0, 0)),   # W_V^T
            pl.BlockSpec((n_heads * d_v, H), lambda b: (0, 0)),   # fc^T
        ],
        out_specs=pl.BlockSpec((1, T, H), lambda b: (b, 0, 0)),
        scratch_shapes=[pltpu.VMEM((T, H), jnp.float32)],         # lstm_out buffer
        compiler_params=pltpu.CompilerParams(
            dimension_semantics=("parallel",)),                   # batch across TCs (v7x)
    )(x_in, ci, other, wih_t, whh_t, b_lstm, wq_t, wk_t, wv_t, wfc_t)


# --------------------------- deterministic params ---------------------------

def init_params(key, d_model, n_heads=4, d_k=64, d_v=64):
    In = 4 * d_model
    H = 2 * d_model
    ks = jax.random.split(key, 8)
    f32 = jnp.float32
    s = 1.0 / math.sqrt(H)
    p = {}
    # PyTorch nn.LSTM layout: weight_ih [4H, In], weight_hh [4H, H], gate order (i, f, g, o)
    p["w_ih"] = jax.random.uniform(ks[0], (4 * H, In), f32, -s, s)
    p["w_hh"] = jax.random.uniform(ks[1], (4 * H, H), f32, -s, s)
    p["b_ih"] = jax.random.uniform(ks[2], (4 * H,), f32, -s, s)
    p["b_hh"] = jax.random.uniform(ks[3], (4 * H,), f32, -s, s)
    # MultiHeadAttention(d_model*2=H): W_Q/W_K/W_V Linear(H, n_heads*d_k, bias=False),
    # fc Linear(n_heads*d_v, H, bias=False)  (weights stored [out, in] like nn.Linear)
    p["w_q"] = 0.1 * jax.random.normal(ks[4], (n_heads * d_k, H), f32)
    p["w_k"] = 0.1 * jax.random.normal(ks[5], (n_heads * d_k, H), f32)
    p["w_v"] = 0.1 * jax.random.normal(ks[6], (n_heads * d_v, H), f32)
    p["w_fc"] = 0.1 * jax.random.normal(ks[7], (H, n_heads * d_v), f32)
    p["w"] = jnp.ones((2,), f32)        # nn.Parameter(torch.ones(2))
    return p


# ----------------------------------- main ------------------------------------

if __name__ == "__main__":
    d_model = 32
    n_heads, d_k, d_v = 4, 64, 64       # MultiHeadAttention defaults from the spec
    B, T = 2, 8                         # batch, short-trajectory sequence length
    L = 16                              # long-trajectory length (repeat factor L // T = 2)

    key = jax.random.PRNGKey(0)
    k1, k2, k3, k4, k5, k6, k7 = jax.random.split(key, 7)

    user_emb = jax.random.normal(k1, (B, T, d_model), jnp.float32)
    traj_emb = jax.random.normal(k2, (B, T, d_model), jnp.float32)
    geo_emb = jax.random.normal(k3, (B, T, d_model), jnp.float32)
    center_traj_emb = jax.random.normal(k4, (B, L, d_model), jnp.float32)
    long_traj_emb = jax.random.normal(k5, (B, L, d_model), jnp.float32)
    user_perfence = jax.random.normal(k6, (B, 1, d_model), jnp.float32)
    dt = jax.random.uniform(k7, (B, T, L), jnp.float32, 0.0, 10.0)

    params = init_params(jax.random.PRNGKey(1), d_model, n_heads, d_k, d_v)

    fn = jax.jit(partial(short_term_encoder, n_heads=n_heads, d_k=d_k, d_v=d_v))
    out = fn(params, user_emb, traj_emb, geo_emb,
             center_traj_emb, long_traj_emb, user_perfence, dt)
    jax.block_until_ready(out)

    assert out.shape == (B, T, 2 * d_model)
    assert bool(jnp.all(jnp.isfinite(out)))
    print("KERNEL_OK")
</pallas_src>

<mosaic_0001>
module attributes {stable_mosaic.version = 11 : i64} {
  func.func @_short_term_kernel(%arg0: i32, %arg1: memref<1x8x128xf32, #tpu.memory_space<vmem>>, %arg2: memref<1x16x64xf32, #tpu.memory_space<vmem>>, %arg3: memref<1x8x16xf32, #tpu.memory_space<vmem>>, %arg4: memref<128x256xf32, #tpu.memory_space<vmem>>, %arg5: memref<64x256xf32, #tpu.memory_space<vmem>>, %arg6: memref<1x256xf32, #tpu.memory_space<vmem>>, %arg7: memref<64x256xf32, #tpu.memory_space<vmem>>, %arg8: memref<64x256xf32, #tpu.memory_space<vmem>>, %arg9: memref<64x256xf32, #tpu.memory_space<vmem>>, %arg10: memref<256x64xf32, #tpu.memory_space<vmem>>, %arg11: memref<1x8x64xf32, #tpu.memory_space<vmem>>, %arg12: memref<8x64xf32, #tpu.memory_space<vmem>>) attributes {dimension_semantics = [#tpu.dimension_semantics<parallel>], iteration_bounds = array<i64: 2>, scalar_prefetch = 0 : i64, scratch_operands = 1 : i64, tpu.core_type = #tpu.core_type<tc>, window_params = [{transform_indices = @transform_0, window_bounds = array<i64: 1, 8, 128>}, {transform_indices = @transform_1, window_bounds = array<i64: 1, 16, 64>}, {transform_indices = @transform_2, window_bounds = array<i64: 1, 8, 16>}, {pipeline_mode = #tpu.pipeline_mode<synchronous>, transform_indices = @transform_3, window_bounds = array<i64: 128, 256>}, {pipeline_mode = #tpu.pipeline_mode<synchronous>, transform_indices = @transform_4, window_bounds = array<i64: 64, 256>}, {pipeline_mode = #tpu.pipeline_mode<synchronous>, transform_indices = @transform_5, window_bounds = array<i64: 1, 256>}, {pipeline_mode = #tpu.pipeline_mode<synchronous>, transform_indices = @transform_6, window_bounds = array<i64: 64, 256>}, {pipeline_mode = #tpu.pipeline_mode<synchronous>, transform_indices = @transform_7, window_bounds = array<i64: 64, 256>}, {pipeline_mode = #tpu.pipeline_mode<synchronous>, transform_indices = @transform_8, window_bounds = array<i64: 64, 256>}, {pipeline_mode = #tpu.pipeline_mode<synchronous>, transform_indices = @transform_9, window_bounds = array<i64: 256, 64>}, {transform_indices = @transform_10, window_bounds = array<i64: 1, 8, 64>}]} {
    %c0 = arith.constant 0 : index
    %c0_0 = arith.constant 0 : index
    %c0_1 = arith.constant 0 : index
    %0 = vector.load %arg1[%c0, %c0_0, %c0_1] : memref<1x8x128xf32, #tpu.memory_space<vmem>>, vector<1x8x128xf32>
    %1 = vector.shape_cast %0 : vector<1x8x128xf32> to vector<8x128xf32>
    %c0_2 = arith.constant 0 : index
    %c0_3 = arith.constant 0 : index
    %c0_4 = arith.constant 0 : index
    %2 = vector.load %arg2[%c0_2, %c0_3, %c0_4] : memref<1x16x64xf32, #tpu.memory_space<vmem>>, vector<1x16x64xf32>
    %3 = vector.shape_cast %2 : vector<1x16x64xf32> to vector<16x64xf32>
    %c0_5 = arith.constant 0 : index
    %c0_6 = arith.constant 0 : index
    %c0_7 = arith.constant 0 : index
    %4 = vector.load %arg3[%c0_5, %c0_6, %c0_7] : memref<1x8x16xf32, #tpu.memory_space<vmem>>, vector<1x8x16xf32>
    %5 = vector.shape_cast %4 : vector<1x8x16xf32> to vector<8x16xf32>
    %c0_8 = arith.constant 0 : index
    %c0_9 = arith.constant 0 : index
    %6 = vector.load %arg4[%c0_8, %c0_9] : memref<128x256xf32, #tpu.memory_space<vmem>>, vector<128x256xf32>
    %cst = arith.constant dense<0.000000e+00> : vector<8x256xf32>
    %7 = tpu.matmul %1, %6, %cst {dimension_numbers = #tpu.dot_dimension_numbers<[1], [0], [0], [1], [0, 0, 1, 1], [], []>} : vector<8x128xf32>, vector<128x256xf32>, vector<8x256xf32> -> vector<8x256xf32>
    %c0_10 = arith.constant 0 : index
    %c0_11 = arith.constant 0 : index
    %8 = vector.load %arg6[%c0_10, %c0_11] : memref<1x256xf32, #tpu.memory_space<vmem>>, vector<1x256xf32>
    %9 = vector.broadcast %8 : vector<1x256xf32> to vector<8x256xf32>
    %10 = arith.addf %7, %9 : vector<8x256xf32>
    %c0_12 = arith.constant 0 : index
    %c0_13 = arith.constant 0 : index
    %11 = vector.load %arg5[%c0_12, %c0_13] : memref<64x256xf32, #tpu.memory_space<vmem>>, vector<64x256xf32>
    %cst_14 = arith.constant 0.000000e+00 : f32
    %12 = vector.broadcast %cst_14 : f32 to vector<1x64xf32>
    %cst_15 = arith.constant 0.000000e+00 : f32
    %13 = vector.broadcast %cst_15 : f32 to vector<1x64xf32>
    %14 = vector.extract_strided_slice %10 {offsets = [0, 0], sizes = [1, 256], strides = [1, 1]} : vector<8x256xf32> to vector<1x256xf32>
    %cst_16 = arith.constant dense<0.000000e+00> : vector<1x256xf32>
    %15 = tpu.matmul %12, %11, %cst_16 {dimension_numbers = #tpu.dot_dimension_numbers<[1], [0], [0], [1], [0, 0, 1, 1], [], []>} : vector<1x64xf32>, vector<64x256xf32>, vector<1x256xf32> -> vector<1x256xf32>
    %16 = arith.addf %14, %15 : vector<1x256xf32>
    %17 = vector.extract_strided_slice %16 {offsets = [0, 0], sizes = [1, 64], strides = [1, 1]} : vector<1x256xf32> to vector<1x64xf32>
    %cst_17 = arith.constant 0.000000e+00 : f32
    %18 = vector.broadcast %cst_17 : f32 to vector<1x64xf32>
    %19 = arith.subf %18, %17 : vector<1x64xf32>
    %20 = math.exp %19 : vector<1x64xf32>
    %cst_18 = arith.constant 1.000000e+00 : f32
    %21 = vector.broadcast %cst_18 : f32 to vector<1x64xf32>
    %22 = arith.addf %21, %20 : vector<1x64xf32>
    %cst_19 = arith.constant 1.000000e+00 : f32
    %23 = vector.broadcast %cst_19 : f32 to vector<1x64xf32>
    %24 = arith.divf %23, %22 : vector<1x64xf32>
    %25 = vector.extract_strided_slice %16 {offsets = [0, 64], sizes = [1, 64], strides = [1, 1]} : vector<1x256xf32> to vector<1x64xf32>
    %cst_20 = arith.constant 0.000000e+00 : f32
    %26 = vector.broadcast %cst_20 : f32 to vector<1x64xf32>
    %27 = arith.subf %26, %25 : vector<1x64xf32>
    %28 = math.exp %27 : vector<1x64xf32>
    %cst_21 = arith.constant 1.000000e+00 : f32
    %29 = vector.broadcast %cst_21 : f32 to vector<1x64xf32>
    %30 = arith.addf %29, %28 : vector<1x64xf32>
    %cst_22 = arith.constant 1.000000e+00 : f32
    %31 = vector.broadcast %cst_22 : f32 to vector<1x64xf32>
    %32 = arith.divf %31, %30 : vector<1x64xf32>
    %33 = vector.extract_strided_slice %16 {offsets = [0, 128], sizes = [1, 64], strides = [1, 1]} : vector<1x256xf32> to vector<1x64xf32>
    %34 = math.tanh %33 : vector<1x64xf32>
    %35 = vector.extract_strided_slice %16 {offsets = [0, 192], sizes = [1, 64], strides = [1, 1]} : vector<1x256xf32> to vector<1x64xf32>
    %cst_23 = arith.constant 0.000000e+00 : f32
    %36 = vector.broadcast %cst_23 : f32 to vector<1x64xf32>
    %37 = arith.subf %36, %35 : vector<1x64xf32>
    %38 = math.exp %37 : vector<1x64xf32>
    %cst_24 = arith.constant 1.000000e+00 : f32
    %39 = vector.broadcast %cst_24 : f32 to vector<1x64xf32>
    %40 = arith.addf %39, %38 : vector<1x64xf32>
    %cst_25 = arith.constant 1.000000e+00 : f32
    %41 = vector.broadcast %cst_25 : f32 to vector<1x64xf32>
    %42 = arith.divf %41, %40 : vector<1x64xf32>
    %43 = arith.mulf %32, %13 : vector<1x64xf32>
    %44 = arith.mulf %24, %34 : vector<1x64xf32>
    %45 = arith.addf %43, %44 : vector<1x64xf32>
    %46 = math.tanh %45 : vector<1x64xf32>
    %47 = arith.mulf %42, %46 : vector<1x64xf32>
    %c0_26 = arith.constant 0 : index
    %c0_27 = arith.constant 0 : index
    %48 = vector.load %arg12[%c0_26, %c0_27] : memref<8x64xf32, #tpu.memory_space<vmem>>, vector<1x64xf32>
    tpu.vector_store %arg12[%c0_26, %c0_27], %47 {strides = array<i32>} : memref<8x64xf32, #tpu.memory_space<vmem>>, vector<1x64xf32>,
    %49 = vector.extract_strided_slice %10 {offsets = [1, 0], sizes = [1, 256], strides = [1, 1]} : vector<8x256xf32> to vector<1x256xf32>
    %cst_28 = arith.constant dense<0.000000e+00> : vector<1x256xf32>
    %50 = tpu.matmul %47, %11, %cst_28 {dimension_numbers = #tpu.dot_dimension_numbers<[1], [0], [0], [1], [0, 0, 1, 1], [], []>} : vector<1x64xf32>, vector<64x256xf32>, vector<1x256xf32> -> vector<1x256xf32>
    %51 = arith.addf %49, %50 : vector<1x256xf32>
    %52 = vector.extract_strided_slice %51 {offsets = [0, 0], sizes = [1, 64], strides = [1, 1]} : vector<1x256xf32> to vector<1x64xf32>
    %cst_29 = arith.constant 0.000000e+00 : f32
    %53 = vector.broadcast %cst_29 : f32 to vector<1x64xf32>
    %54 = arith.subf %53, %52 : vector<1x64xf32>
    %55 = math.exp %54 : vector<1x64xf32>
    %cst_30 = arith.constant 1.000000e+00 : f32
    %56 = vector.broadcast %cst_30 : f32 to vector<1x64xf32>
    %57 = arith.addf %56, %55 : vector<1x64xf32>
    %cst_31 = arith.constant 1.000000e+00 : f32
    %58 = vector.broadcast %cst_31 : f32 to vector<1x64xf32>
    %59 = arith.divf %58, %57 : vector<1x64xf32>
    %60 = vector.extract_strided_slice %51 {offsets = [0, 64], sizes = [1, 64], strides = [1, 1]} : vector<1x256xf32> to vector<1x64xf32>
    %cst_32 = arith.constant 0.000000e+00 : f32
    %61 = vector.broadcast %cst_32 : f32 to vector<1x64xf32>
    %62 = arith.subf %61, %60 : vector<1x64xf32>
    %63 = math.exp %62 : vector<1x64xf32>
    %cst_33 = arith.constant 1.000000e+00 : f32
    %64 = vector.broadcast %cst_33 : f32 to vector<1x64xf32>
    %65 = arith.addf %64, %63 : vector<1x64xf32>
    %cst_34 = arith.constant 1.000000e+00 : f32
    %66 = vector.broadcast %cst_34 : f32 to vector<1x64xf32>
    %67 = arith.divf %66, %65 : vector<1x64xf32>
    %68 = vector.extract_strided_slice %51 {offsets = [0, 128], sizes = [1, 64], strides = [1, 1]} : vector<1x256xf32> to vector<1x64xf32>
    %69 = math.tanh %68 : vector<1x64xf32>
    %70 = vector.extract_strided_slice %51 {offsets = [0, 192], sizes = [1, 64], strides = [1, 1]} : vector<1x256xf32> to vector<1x64xf32>
    %cst_35 = arith.constant 0.000000e+00 : f32
    %71 = vector.broadcast %cst_35 : f32 to vector<1x64xf32>
    %72 = arith.subf %71, %70 : vector<1x64xf32>
    %73 = math.exp %72 : vector<1x64xf32>
    %cst_36 = arith.constant 1.000000e+00 : f32
    %74 = vector.broadcast %cst_36 : f32 to vector<1x64xf32>
    %75 = arith.addf %74, %73 : vector<1x64xf32>
    %cst_37 = arith.constant 1.000000e+00 : f32
    %76 = vector.broadcast %cst_37 : f32 to vector<1x64xf32>
    %77 = arith.divf %76, %75 : vector<1x64xf32>
    %78 = arith.mulf %67, %45 : vector<1x64xf32>
    %79 = arith.mulf %59, %69 : vector<1x64xf32>
    %80 = arith.addf %78, %79 : vector<1x64xf32>
    %81 = math.tanh %80 : vector<1x64xf32>
    %82 = arith.mulf %77, %81 : vector<1x64xf32>
    %c1 = arith.constant 1 : index
    %c0_38 = arith.constant 0 : index
    %83 = vector.load %arg12[%c1, %c0_38] : memref<8x64xf32, #tpu.memory_space<vmem>>, vector<1x64xf32>
    tpu.vector_store %arg12[%c1, %c0_38], %82 {strides = array<i32>} : memref<8x64xf32, #tpu.memory_space<vmem>>, vector<1x64xf32>,
    %84 = vector.extract_strided_slice %10 {offsets = [2, 0], sizes = [1, 256], strides = [1, 1]} : vector<8x256xf32> to vector<1x256xf32>
    %cst_39 = arith.constant dense<0.000000e+00> : vector<1x256xf32>
    %85 = tpu.matmul %82, %11, %cst_39 {dimension_numbers = #tpu.dot_dimension_numbers<[1], [0], [0], [1], [0, 0, 1, 1], [], []>} : vector<1x64xf32>, vector<64x256xf32>, vector<1x256xf32> -> vector<1x256xf32>
    %86 = arith.addf %84, %85 : vector<1x256xf32>
    %87 = vector.extract_strided_slice %86 {offsets = [0, 0], sizes = [1, 64], strides = [1, 1]} : vector<1x256xf32> to vector<1x64xf32>
    %cst_40 = arith.constant 0.000000e+00 : f32
    %88 = vector.broadcast %cst_40 : f32 to vector<1x64xf32>
    %89 = arith.subf %88, %87 : vector<1x64xf32>
    %90 = math.exp %89 : vector<1x64xf32>
    %cst_41 = arith.constant 1.000000e+00 : f32
    %91 = vector.broadcast %cst_41 : f32 to vector<1x64xf32>
    %92 = arith.addf %91, %90 : vector<1x64xf32>
    %cst_42 = arith.constant 1.000000e+00 : f32
    %93 = vector.broadcast %cst_42 : f32 to vector<1x64xf32>
    %94 = arith.divf %93, %92 : vector<1x64xf32>
    %95 = vector.extract_strided_slice %86 {offsets = [0, 64], sizes = [1, 64], strides = [1, 1]} : vector<1x256xf32> to vector<1x64xf32>
    %cst_43 = arith.constant 0.000000e+00 : f32
    %96 = vector.broadcast %cst_43 : f32 to vector<1x64xf32>
    %97 = arith.subf %96, %95 : vector<1x64xf32>
    %98 = math.exp %97 : vector<1x64xf32>
    %cst_44 = arith.constant 1.000000e+00 : f32
    %99 = vector.broadcast %cst_44 : f32 to vector<1x64xf32>
    %100 = arith.addf %99, %98 : vector<1x64xf32>
    %cst_45 = arith.constant 1.000000e+00 : f32
    %101 = vector.broadcast %cst_45 : f32 to vector<1x64xf32>
    %102 = arith.divf %101, %100 : vector<1x64xf32>
    %103 = vector.extract_strided_slice %86 {offsets = [0, 128], sizes = [1, 64], strides = [1, 1]} : vector<1x256xf32> to vector<1x64xf32>
    %104 = math.tanh %103 : vector<1x64xf32>
    %105 = vector.extract_strided_slice %86 {offsets = [0, 192], sizes = [1, 64], strides = [1, 1]} : vector<1x256xf32> to vector<1x64xf32>
    %cst_46 = arith.constant 0.000000e+00 : f32
    %106 = vector.broadcast %cst_46 : f32 to vector<1x64xf32>
    %107 = arith.subf %106, %105 : vector<1x64xf32>
    %108 = math.exp %107 : vector<1x64xf32>
    %cst_47 = arith.constant 1.000000e+00 : f32
    %109 = vector.broadcast %cst_47 : f32 to vector<1x64xf32>
    %110 = arith.addf %109, %108 : vector<1x64xf32>
    %cst_48 = arith.constant 1.000000e+00 : f32
    %111 = vector.broadcast %cst_48 : f32 to vector<1x64xf32>
    %112 = arith.divf %111, %110 : vector<1x64xf32>
    %113 = arith.mulf %102, %80 : vector<1x64xf32>
    %114 = arith.mulf %94, %104 : vector<1x64xf32>
    %115 = arith.addf %113, %114 : vector<1x64xf32>
    %116 = math.tanh %115 : vector<1x64xf32>
    %117 = arith.mulf %112, %116 : vector<1x64xf32>
    %c2 = arith.constant 2 : index
    %c0_49 = arith.constant 0 : index
    %118 = vector.load %arg12[%c2, %c0_49] : memref<8x64xf32, #tpu.memory_space<vmem>>, vector<1x64xf32>
    tpu.vector_store %arg12[%c2, %c0_49], %117 {strides = array<i32>} : memref<8x64xf32, #tpu.memory_space<vmem>>, vector<1x64xf32>,
    %119 = vector.extract_strided_slice %10 {offsets = [3, 0], sizes = [1, 256], strides = [1, 1]} : vector<8x256xf32> to vector<1x256xf32>
    %cst_50 = arith.constant dense<0.000000e+00> : vector<1x256xf32>
    %120 = tpu.matmul %117, %11, %cst_50 {dimension_numbers = #tpu.dot_dimension_numbers<[1], [0], [0], [1], [0, 0, 1, 1], [], []>} : vector<1x64xf32>, vector<64x256xf32>, vector<1x256xf32> -> vector<1x256xf32>
    %121 = arith.addf %119, %120 : vector<1x256xf32>
    %122 = vector.extract_strided_slice %121 {offsets = [0, 0], sizes = [1, 64], strides = [1, 1]} : vector<1x256xf32> to vector<1x64xf32>
    %cst_51 = arith.constant 0.000000e+00 : f32
    %123 = vector.broadcast %cst_51 : f32 to vector<1x64xf32>
    %124 = arith.subf %123, %122 : vector<1x64xf32>
    %125 = math.exp %124 : vector<1x64xf32>
    %cst_52 = arith.constant 1.000000e+00 : f32
    %126 = vector.broadcast %cst_52 : f32 to vector<1x64xf32>
    %127 = arith.addf %126, %125 : vector<1x64xf32>
    %cst_53 = arith.constant 1.000000e+00 : f32
    %128 = vector.broadcast %cst_53 : f32 to vector<1x64xf32>
    %129 = arith.divf %128, %127 : vector<1x64xf32>
    %130 = vector.extract_strided_slice %121 {offsets = [0, 64], sizes = [1, 64], strides = [1, 1]} : vector<1x256xf32> to vector<1x64xf32>
    %cst_54 = arith.constant 0.000000e+00 : f32
    %131 = vector.broadcast %cst_54 : f32 to vector<1x64xf32>
    %132 = arith.subf %131, %130 : vector<1x64xf32>
    %133 = math.exp %132 : vector<1x64xf32>
    %cst_55 = arith.constant 1.000000e+00 : f32
    %134 = vector.broadcast %cst_55 : f32 to vector<1x64xf32>
    %135 = arith.addf %134, %133 : vector<1x64xf32>
    %cst_56 = arith.constant 1.000000e+00 : f32
    %136 = vector.broadcast %cst_56 : f32 to vector<1x64xf32>
    %137 = arith.divf %136, %135 : vector<1x64xf32>
    %138 = vector.extract_strided_slice %121 {offsets = [0, 128], sizes = [1, 64], strides = [1, 1]} : vector<1x256xf32> to vector<1x64xf32>
    %139 = math.tanh %138 : vector<1x64xf32>
    %140 = vector.extract_strided_slice %121 {offsets = [0, 192], sizes = [1, 64], strides = [1, 1]} : vector<1x256xf32> to vector<1x64xf32>
    %cst_57 = arith.constant 0.000000e+00 : f32
    %141 = vector.broadcast %cst_57 : f32 to vector<1x64xf32>
    %142 = arith.subf %141, %140 : vector<1x64xf32>
    %143 = math.exp %142 : vector<1x64xf32>
    %cst_58 = arith.constant 1.000000e+00 : f32
    %144 = vector.broadcast %cst_58 : f32 to vector<1x64xf32>
    %145 = arith.addf %144, %143 : vector<1x64xf32>
    %cst_59 = arith.constant 1.000000e+00 : f32
    %146 = vector.broadcast %cst_59 : f32 to vector<1x64xf32>
    %147 = arith.divf %146, %145 : vector<1x64xf32>
    %148 = arith.mulf %137, %115 : vector<1x64xf32>
    %149 = arith.mulf %129, %139 : vector<1x64xf32>
    %150 = arith.addf %148, %149 : vector<1x64xf32>
    %151 = math.tanh %150 : vector<1x64xf32>
    %152 = arith.mulf %147, %151 : vector<1x64xf32>
    %c3 = arith.constant 3 : index
    %c0_60 = arith.constant 0 : index
    %153 = vector.load %arg12[%c3, %c0_60] : memref<8x64xf32, #tpu.memory_space<vmem>>, vector<1x64xf32>
    tpu.vector_store %arg12[%c3, %c0_60], %152 {strides = array<i32>} : memref<8x64xf32, #tpu.memory_space<vmem>>, vector<1x64xf32>,
    %154 = vector.extract_strided_slice %10 {offsets = [4, 0], sizes = [1, 256], strides = [1, 1]} : vector<8x256xf32> to vector<1x256xf32>
    %cst_61 = arith.constant dense<0.000000e+00> : vector<1x256xf32>
    %155 = tpu.matmul %152, %11, %cst_61 {dimension_numbers = #tpu.dot_dimension_numbers<[1], [0], [0], [1], [0, 0, 1, 1], [], []>} : vector<1x64xf32>, vector<64x256xf32>, vector<1x256xf32> -> vector<1x256xf32>
    %156 = arith.addf %154, %155 : vector<1x256xf32>
    %157 = vector.extract_strided_slice %156 {offsets = [0, 0], sizes = [1, 64], strides = [1, 1]} : vector<1x256xf32> to vector<1x64xf32>
    %cst_62 = arith.constant 0.000000e+00 : f32
    %158 = vector.broadcast %cst_62 : f32 to vector<1x64xf32>
    %159 = arith.subf %158, %157 : vector<1x64xf32>
    %160 = math.exp %159 : vector<1x64xf32>
    %cst_63 = arith.constant 1.000000e+00 : f32
    %161 = vector.broadcast %cst_63 : f32 to vector<1x64xf32>
    %162 = arith.addf %161, %160 : vector<1x64xf32>
    %cst_64 = arith.constant 1.000000e+00 : f32
    %163 = vector.broadcast %cst_64 : f32 to vector<1x64xf32>
    %164 = arith.divf %163, %162 : vector<1x64xf32>
    %165 = vector.extract_strided_slice %156 {offsets = [0, 64], sizes = [1, 64], strides = [1, 1]} : vector<1x256xf32> to vector<1x64xf32>
    %cst_65 = arith.constant 0.000000e+00 : f32
    %166 = vector.broadcast %cst_65 : f32 to vector<1x64xf32>
    %167 = arith.subf %166, %165 : vector<1x64xf32>
    %168 = math.exp %167 : vector<1x64xf32>
    %cst_66 = arith.constant 1.000000e+00 : f32
    %169 = vector.broadcast %cst_66 : f32 to vector<1x64xf32>
    %170 = arith.addf %169, %168 : vector<1x64xf32>
    %cst_67 = arith.constant 1.000000e+00 : f32
    %171 = vector.broadcast %cst_67 : f32 to vector<1x64xf32>
    %172 = arith.divf %171, %170 : vector<1x64xf32>
    %173 = vector.extract_strided_slice %156 {offsets = [0, 128], sizes = [1, 64], strides = [1, 1]} : vector<1x256xf32> to vector<1x64xf32>
    %174 = math.tanh %173 : vector<1x64xf32>
    %175 = vector.extract_strided_slice %156 {offsets = [0, 192], sizes = [1, 64], strides = [1, 1]} : vector<1x256xf32> to vector<1x64xf32>
    %cst_68 = arith.constant 0.000000e+00 : f32
    %176 = vector.broadcast %cst_68 : f32 to vector<1x64xf32>
    %177 = arith.subf %176, %175 : vector<1x64xf32>
    %178 = math.exp %177 : vector<1x64xf32>
    %cst_69 = arith.constant 1.000000e+00 : f32
    %179 = vector.broadcast %cst_69 : f32 to vector<1x64xf32>
    %180 = arith.addf %179, %178 : vector<1x64xf32>
    %cst_70 = arith.constant 1.000000e+00 : f32
    %181 = vector.broadcast %cst_70 : f32 to vector<1x64xf32>
    %182 = arith.divf %181, %180 : vector<1x64xf32>
    %183 = arith.mulf %172, %150 : vector<1x64xf32>
    %184 = arith.mulf %164, %174 : vector<1x64xf32>
    %185 = arith.addf %183, %184 : vector<1x64xf32>
    %186 = math.tanh %185 : vector<1x64xf32>
    %187 = arith.mulf %182, %186 : vector<1x64xf32>
    %c4 = arith.constant 4 : index
    %c0_71 = arith.constant 0 : index
    %188 = vector.load %arg12[%c4, %c0_71] : memref<8x64xf32, #tpu.memory_space<vmem>>, vector<1x64xf32>
    tpu.vector_store %arg12[%c4, %c0_71], %187 {strides = array<i32>} : memref<8x64xf32, #tpu.memory_space<vmem>>, vector<1x64xf32>,
    %189 = vector.extract_strided_slice %10 {offsets = [5, 0], sizes = [1, 256], strides = [1, 1]} : vector<8x256xf32> to vector<1x256xf32>
    %cst_72 = arith.constant dense<0.000000e+00> : vector<1x256xf32>
    %190 = tpu.matmul %187, %11, %cst_72 {dimension_numbers = #tpu.dot_dimension_numbers<[1], [0], [0], [1], [0, 0, 1, 1], [], []>} : vector<1x64xf32>, vector<64x256xf32>, vector<1x256xf32> -> vector<1x256xf32>
    %191 = arith.addf %189, %190 : vector<1x256xf32>
    %192 = vector.extract_strided_slice %191 {offsets = [0, 0], sizes = [1, 64], strides = [1, 1]} : vector<1x256xf32> to vector<1x64xf32>
    %cst_73 = arith.constant 0.000000e+00 : f32
    %193 = vector.broadcast %cst_73 : f32 to vector<1x64xf32>
    %194 = arith.subf %193, %192 : vector<1x64xf32>
    %195 = math.exp %194 : vector<1x64xf32>
    %cst_74 = arith.constant 1.000000e+00 : f32
    %196 = vector.broadcast %cst_74 : f32 to vector<1x64xf32>
    %197 = arith.addf %196, %195 : vector<1x64xf32>
    %cst_75 = arith.constant 1.000000e+00 : f32
    %198 = vector.broadcast %cst_75 : f32 to vector<1x64xf32>
    %199 = arith.divf %198, %197 : vector<1x64xf32>
    %200 = vector.extract_strided_slice %191 {offsets = [0, 64], sizes = [1, 64], strides = [1, 1]} : vector<1x256xf32> to vector<1x64xf32>
    %cst_76 = arith.constant 0.000000e+00 : f32
    %201 = vector.broadcast %cst_76 : f32 to vector<1x64xf32>
    %202 = arith.subf %201, %200 : vector<1x64xf32>
    %203 = math.exp %202 : vector<1x64xf32>
    %cst_77 = arith.constant 1.000000e+00 : f32
    %204 = vector.broadcast %cst_77 : f32 to vector<1x64xf32>
    %205 = arith.addf %204, %203 : vector<1x64xf32>
    %cst_78 = arith.constant 1.000000e+00 : f32
    %206 = vector.broadcast %cst_78 : f32 to vector<1x64xf32>
    %207 = arith.divf %206, %205 : vector<1x64xf32>
    %208 = vector.extract_strided_slice %191 {offsets = [0, 128], sizes = [1, 64], strides = [1, 1]} : vector<1x256xf32> to vector<1x64xf32>
    %209 = math.tanh %208 : vector<1x64xf32>
    %210 = vector.extract_strided_slice %191 {offsets = [0, 192], sizes = [1, 64], strides = [1, 1]} : vector<1x256xf32> to vector<1x64xf32>
    %cst_79 = arith.constant 0.000000e+00 : f32
    %211 = vector.broadcast %cst_79 : f32 to vector<1x64xf32>
    %212 = arith.subf %211, %210 : vector<1x64xf32>
    %213 = math.exp %212 : vector<1x64xf32>
    %cst_80 = arith.constant 1.000000e+00 : f32
    %214 = vector.broadcast %cst_80 : f32 to vector<1x64xf32>
    %215 = arith.addf %214, %213 : vector<1x64xf32>
    %cst_81 = arith.constant 1.000000e+00 : f32
    %216 = vector.broadcast %cst_81 : f32 to vector<1x64xf32>
    %217 = arith.divf %216, %215 : vector<1x64xf32>
    %218 = arith.mulf %207, %185 : vector<1x64xf32>
    %219 = arith.mulf %199, %209 : vector<1x64xf32>
    %220 = arith.addf %218, %219 : vector<1x64xf32>
    %221 = math.tanh %220 : vector<1x64xf32>
    %222 = arith.mulf %217, %221 : vector<1x64xf32>
    %c5 = arith.constant 5 : index
    %c0_82 = arith.constant 0 : index
    %223 = vector.load %arg12[%c5, %c0_82] : memref<8x64xf32, #tpu.memory_space<vmem>>, vector<1x64xf32>
    tpu.vector_store %arg12[%c5, %c0_82], %222 {strides = array<i32>} : memref<8x64xf32, #tpu.memory_space<vmem>>, vector<1x64xf32>,
    %224 = vector.extract_strided_slice %10 {offsets = [6, 0], sizes = [1, 256], strides = [1, 1]} : vector<8x256xf32> to vector<1x256xf32>
    %cst_83 = arith.constant dense<0.000000e+00> : vector<1x256xf32>
    %225 = tpu.matmul %222, %11, %cst_83 {dimension_numbers = #tpu.dot_dimension_numbers<[1], [0], [0], [1], [0, 0, 1, 1], [], []>} : vector<1x64xf32>, vector<64x256xf32>, vector<1x256xf32> -> vector<1x256xf32>
    %226 = arith.addf %224, %225 : vector<1x256xf32>
    %227 = vector.extract_strided_slice %226 {offsets = [0, 0], sizes = [1, 64], strides = [1, 1]} : vector<1x256xf32> to vector<1x64xf32>
    %cst_84 = arith.constant 0.000000e+00 : f32
    %228 = vector.broadcast %cst_84 : f32 to vector<1x64xf32>
    %229 = arith.subf %228, %227 : vector<1x64xf32>
    %230 = math.exp %229 : vector<1x64xf32>
    %cst_85 = arith.constant 1.000000e+00 : f32
    %231 = vector.broadcast %cst_85 : f32 to vector<1x64xf32>
    %232 = arith.addf %231, %230 : vector<1x64xf32>
    %cst_86 = arith.constant 1.000000e+00 : f32
    %233 = vector.broadcast %cst_86 : f32 to vector<1x64xf32>
    %234 = arith.divf %233, %232 : vector<1x64xf32>
    %235 = vector.extract_strided_slice %226 {offsets = [0, 64], sizes = [1, 64], strides = [1, 1]} : vector<1x256xf32> to vector<1x64xf32>
    %cst_87 = arith.constant 0.000000e+00 : f32
    %236 = vector.broadcast %cst_87 : f32 to vector<1x64xf32>
    %237 = arith.subf %236, %235 : vector<1x64xf32>
    %238 = math.exp %237 : vector<1x64xf32>
    %cst_88 = arith.constant 1.000000e+00 : f32
    %239 = vector.broadcast %cst_88 : f32 to vector<1x64xf32>
    %240 = arith.addf %239, %238 : vector<1x64xf32>
    %cst_89 = arith.constant 1.000000e+00 : f32
    %241 = vector.broadcast %cst_89 : f32 to vector<1x64xf32>
    %242 = arith.divf %241, %240 : vector<1x64xf32>
    %243 = vector.extract_strided_slice %226 {offsets = [0, 128], sizes = [1, 64], strides = [1, 1]} : vector<1x256xf32> to vector<1x64xf32>
    %244 = math.tanh %243 : vector<1x64xf32>
    %245 = vector.extract_strided_slice %226 {offsets = [0, 192], sizes = [1, 64], strides = [1, 1]} : vector<1x256xf32> to vector<1x64xf32>
    %cst_90 = arith.constant 0.000000e+00 : f32
    %246 = vector.broadcast %cst_90 : f32 to vector<1x64xf32>
    %247 = arith.subf %246, %245 : vector<1x64xf32>
    %248 = math.exp %247 : vector<1x64xf32>
    %cst_91 = arith.constant 1.000000e+00 : f32
    %249 = vector.broadcast %cst_91 : f32 to vector<1x64xf32>
    %250 = arith.addf %249, %248 : vector<1x64xf32>
    %cst_92 = arith.constant 1.000000e+00 : f32
    %251 = vector.broadcast %cst_92 : f32 to vector<1x64xf32>
    %252 = arith.divf %251, %250 : vector<1x64xf32>
    %253 = arith.mulf %242, %220 : vector<1x64xf32>
    %254 = arith.mulf %234, %244 : vector<1x64xf32>
    %255 = arith.addf %253, %254 : vector<1x64xf32>
    %256 = math.tanh %255 : vector<1x64xf32>
    %257 = arith.mulf %252, %256 : vector<1x64xf32>
    %c6 = arith.constant 6 : index
    %c0_93 = arith.constant 0 : index
    %258 = vector.load %arg12[%c6, %c0_93] : memref<8x64xf32, #tpu.memory_space<vmem>>, vector<1x64xf32>
    tpu.vector_store %arg12[%c6, %c0_93], %257 {strides = array<i32>} : memref<8x64xf32, #tpu.memory_space<vmem>>, vector<1x64xf32>,
    %259 = vector.extract_strided_slice %10 {offsets = [7, 0], sizes = [1, 256], strides = [1, 1]} : vector<8x256xf32> to vector<1x256xf32>
    %cst_94 = arith.constant dense<0.000000e+00> : vector<1x256xf32>
    %260 = tpu.matmul %257, %11, %cst_94 {dimension_numbers = #tpu.dot_dimension_numbers<[1], [0], [0], [1], [0, 0, 1, 1], [], []>} : vector<1x64xf32>, vector<64x256xf32>, vector<1x256xf32> -> vector<1x256xf32>
    %261 = arith.addf %259, %260 : vector<1x256xf32>
    %262 = vector.extract_strided_slice %261 {offsets = [0, 0], sizes = [1, 64], strides = [1, 1]} : vector<1x256xf32> to vector<1x64xf32>
    %cst_95 = arith.constant 0.000000e+00 : f32
    %263 = vector.broadcast %cst_95 : f32 to vector<1x64xf32>
    %264 = arith.subf %263, %262 : vector<1x64xf32>
    %265 = math.exp %264 : vector<1x64xf32>
    %cst_96 = arith.constant 1.000000e+00 : f32
    %266 = vector.broadcast %cst_96 : f32 to vector<1x64xf32>
    %267 = arith.addf %266, %265 : vector<1x64xf32>
    %cst_97 = arith.constant 1.000000e+00 : f32
    %268 = vector.broadcast %cst_97 : f32 to vector<1x64xf32>
    %269 = arith.divf %268, %267 : vector<1x64xf32>
    %270 = vector.extract_strided_slice %261 {offsets = [0, 64], sizes = [1, 64], strides = [1, 1]} : vector<1x256xf32> to vector<1x64xf32>
    %cst_98 = arith.constant 0.000000e+00 : f32
    %271 = vector.broadcast %cst_98 : f32 to vector<1x64xf32>
    %272 = arith.subf %271, %270 : vector<1x64xf32>
    %273 = math.exp %272 : vector<1x64xf32>
    %cst_99 = arith.constant 1.000000e+00 : f32
    %274 = vector.broadcast %cst_99 : f32 to vector<1x64xf32>
    %275 = arith.addf %274, %273 : vector<1x64xf32>
    %cst_100 = arith.constant 1.000000e+00 : f32
    %276 = vector.broadcast %cst_100 : f32 to vector<1x64xf32>
    %277 = arith.divf %276, %275 : vector<1x64xf32>
    %278 = vector.extract_strided_slice %261 {offsets = [0, 128], sizes = [1, 64], strides = [1, 1]} : vector<1x256xf32> to vector<1x64xf32>
    %279 = math.tanh %278 : vector<1x64xf32>
    %280 = vector.extract_strided_slice %261 {offsets = [0, 192], sizes = [1, 64], strides = [1, 1]} : vector<1x256xf32> to vector<1x64xf32>
    %cst_101 = arith.constant 0.000000e+00 : f32
    %281 = vector.broadcast %cst_101 : f32 to vector<1x64xf32>
    %282 = arith.subf %281, %280 : vector<1x64xf32>
    %283 = math.exp %282 : vector<1x64xf32>
    %cst_102 = arith.constant 1.000000e+00 : f32
    %284 = vector.broadcast %cst_102 : f32 to vector<1x64xf32>
    %285 = arith.addf %284, %283 : vector<1x64xf32>
    %cst_103 = arith.constant 1.000000e+00 : f32
    %286 = vector.broadcast %cst_103 : f32 to vector<1x64xf32>
    %287 = arith.divf %286, %285 : vector<1x64xf32>
    %288 = arith.mulf %277, %255 : vector<1x64xf32>
    %289 = arith.mulf %269, %279 : vector<1x64xf32>
    %290 = arith.addf %288, %289 : vector<1x64xf32>
    %291 = math.tanh %290 : vector<1x64xf32>
    %292 = arith.mulf %287, %291 : vector<1x64xf32>
    %c7 = arith.constant 7 : index
    %c0_104 = arith.constant 0 : index
    %293 = vector.load %arg12[%c7, %c0_104] : memref<8x64xf32, #tpu.memory_space<vmem>>, vector<1x64xf32>
    tpu.vector_store %arg12[%c7, %c0_104], %292 {strides = array<i32>} : memref<8x64xf32, #tpu.memory_space<vmem>>, vector<1x64xf32>,
    %c0_105 = arith.constant 0 : index
    %c0_106 = arith.constant 0 : index
    %294 = vector.load %arg12[%c0_105, %c0_106] : memref<8x64xf32, #tpu.memory_space<vmem>>, vector<8x64xf32>
    %c0_107 = arith.constant 0 : index
    %c0_108 = arith.constant 0 : index
    %295 = vector.load %arg7[%c0_107, %c0_108] : memref<64x256xf32, #tpu.memory_space<vmem>>, vector<64x256xf32>
    %cst_109 = arith.constant dense<0.000000e+00> : vector<8x256xf32>
    %296 = tpu.matmul %294, %295, %cst_109 {dimension_numbers = #tpu.dot_dimension_numbers<[1], [0], [0], [1], [0, 0, 1, 1], [], []>} : vector<8x64xf32>, vector<64x256xf32>, vector<8x256xf32> -> vector<8x256xf32>
    %c0_110 = arith.constant 0 : index
    %c0_111 = arith.constant 0 : index
    %297 = vector.load %arg8[%c0_110, %c0_111] : memref<64x256xf32, #tpu.memory_space<vmem>>, vector<64x256xf32>
    %cst_112 = arith.constant dense<0.000000e+00> : vector<16x256xf32>
    %298 = tpu.matmul %3, %297, %cst_112 {dimension_numbers = #tpu.dot_dimension_numbers<[1], [0], [0], [1], [0, 0, 1, 1], [], []>} : vector<16x64xf32>, vector<64x256xf32>, vector<16x256xf32> -> vector<16x256xf32>
    %c0_113 = arith.constant 0 : index
    %c0_114 = arith.constant 0 : index
    %299 = vector.load %arg9[%c0_113, %c0_114] : memref<64x256xf32, #tpu.memory_space<vmem>>, vector<64x256xf32>
    %cst_115 = arith.constant dense<0.000000e+00> : vector<16x256xf32>
    %300 = tpu.matmul %3, %299, %cst_115 {dimension_numbers = #tpu.dot_dimension_numbers<[1], [0], [0], [1], [0, 0, 1, 1], [], []>} : vector<16x64xf32>, vector<64x256xf32>, vector<16x256xf32> -> vector<16x256xf32>
    %301 = vector.extract_strided_slice %296 {offsets = [0, 0], sizes = [8, 64], strides = [1, 1]} : vector<8x256xf32> to vector<8x64xf32>
    %302 = vector.extract_strided_slice %298 {offsets = [0, 0], sizes = [16, 64], strides = [1, 1]} : vector<16x256xf32> to vector<16x64xf32>
    %303 = vector.extract_strided_slice %300 {offsets = [0, 0], sizes = [16, 64], strides = [1, 1]} : vector<16x256xf32> to vector<16x64xf32>
    %cst_116 = arith.constant dense<0.000000e+00> : vector<8x16xf32>
    %304 = tpu.matmul %301, %302, %cst_116 {dimension_numbers = #tpu.dot_dimension_numbers<[1], [1], [0], [0], [0, 0, 1, 0], [], []>} : vector<8x64xf32>, vector<16x64xf32>, vector<8x16xf32> -> vector<8x16xf32>
    %cst_117 = arith.constant 1.250000e-01 : f32
    %305 = vector.broadcast %cst_117 : f32 to vector<8x16xf32>
    %306 = arith.mulf %304, %305 : vector<8x16xf32>
    %307 = arith.addf %306, %5 : vector<8x16xf32>
    %cst_118 = arith.constant dense<0xFF800000> : vector<8xf32>
    %308 = vector.multi_reduction <maximumf>, %307, %cst_118 [1] : vector<8x16xf32> to vector<8xf32>
    %309 = vector.shape_cast %308 : vector<8xf32> to vector<8x1xf32>
    %310 = vector.broadcast %309 : vector<8x1xf32> to vector<8x16xf32>
    %311 = arith.subf %307, %310 : vector<8x16xf32>
    %312 = math.exp %311 : vector<8x16xf32>
    %cst_119 = arith.constant dense<0.000000e+00> : vector<8xf32>
    %313 = vector.multi_reduction <add>, %312, %cst_119 [1] : vector<8x16xf32> to vector<8xf32>
    %314 = vector.shape_cast %313 : vector<8xf32> to vector<8x1xf32>
    %315 = vector.broadcast %314 : vector<8x1xf32> to vector<8x16xf32>
    %316 = arith.divf %312, %315 : vector<8x16xf32>
    %cst_120 = arith.constant dense<0.000000e+00> : vector<8x64xf32>
    %317 = tpu.matmul %316, %303, %cst_120 {dimension_numbers = #tpu.dot_dimension_numbers<[1], [0], [0], [1], [0, 0, 1, 1], [], []>} : vector<8x16xf32>, vector<16x64xf32>, vector<8x64xf32> -> vector<8x64xf32>
    %318 = vector.extract_strided_slice %296 {offsets = [0, 64], sizes = [8, 64], strides = [1, 1]} : vector<8x256xf32> to vector<8x64xf32>
    %319 = vector.extract_strided_slice %298 {offsets = [0, 64], sizes = [16, 64], strides = [1, 1]} : vector<16x256xf32> to vector<16x64xf32>
    %320 = vector.extract_strided_slice %300 {offsets = [0, 64], sizes = [16, 64], strides = [1, 1]} : vector<16x256xf32> to vector<16x64xf32>
    %cst_121 = arith.constant dense<0.000000e+00> : vector<8x16xf32>
    %321 = tpu.matmul %318, %319, %cst_121 {dimension_numbers = #tpu.dot_dimension_numbers<[1], [1], [0], [0], [0, 0, 1, 0], [], []>} : vector<8x64xf32>, vector<16x64xf32>, vector<8x16xf32> -> vector<8x16xf32>
    %cst_122 = arith.constant 1.250000e-01 : f32
    %322 = vector.broadcast %cst_122 : f32 to vector<8x16xf32>
    %323 = arith.mulf %321, %322 : vector<8x16xf32>
    %324 = arith.addf %323, %5 : vector<8x16xf32>
    %cst_123 = arith.constant dense<0xFF800000> : vector<8xf32>
    %325 = vector.multi_reduction <maximumf>, %324, %cst_123 [1] : vector<8x16xf32> to vector<8xf32>
    %326 = vector.shape_cast %325 : vector<8xf32> to vector<8x1xf32>
    %327 = vector.broadcast %326 : vector<8x1xf32> to vector<8x16xf32>
    %328 = arith.subf %324, %327 : vector<8x16xf32>
    %329 = math.exp %328 : vector<8x16xf32>
    %cst_124 = arith.constant dense<0.000000e+00> : vector<8xf32>
    %330 = vector.multi_reduction <add>, %329, %cst_124 [1] : vector<8x16xf32> to vector<8xf32>
    %331 = vector.shape_cast %330 : vector<8xf32> to vector<8x1xf32>
    %332 = vector.broadcast %331 : vector<8x1xf32> to vector<8x16xf32>
    %333 = arith.divf %329, %332 : vector<8x16xf32>
    %cst_125 = arith.constant dense<0.000000e+00> : vector<8x64xf32>
    %334 = tpu.matmul %333, %320, %cst_125 {dimension_numbers = #tpu.dot_dimension_numbers<[1], [0], [0], [1], [0, 0, 1, 1], [], []>} : vector<8x16xf32>, vector<16x64xf32>, vector<8x64xf32> -> vector<8x64xf32>
    %335 = vector.extract_strided_slice %296 {offsets = [0, 128], sizes = [8, 64], strides = [1, 1]} : vector<8x256xf32> to vector<8x64xf32>
    %336 = vector.extract_strided_slice %298 {offsets = [0, 128], sizes = [16, 64], strides = [1, 1]} : vector<16x256xf32> to vector<16x64xf32>
    %337 = vector.extract_strided_slice %300 {offsets = [0, 128], sizes = [16, 64], strides = [1, 1]} : vector<16x256xf32> to vector<16x64xf32>
    %cst_126 = arith.constant dense<0.000000e+00> : vector<8x16xf32>
    %338 = tpu.matmul %335, %336, %cst_126 {dimension_numbers = #tpu.dot_dimension_numbers<[1], [1], [0], [0], [0, 0, 1, 0], [], []>} : vector<8x64xf32>, vector<16x64xf32>, vector<8x16xf32> -> vector<8x16xf32>
    %cst_127 = arith.constant 1.250000e-01 : f32
    %339 = vector.broadcast %cst_127 : f32 to vector<8x16xf32>
    %340 = arith.mulf %338, %339 : vector<8x16xf32>
    %341 = arith.addf %340, %5 : vector<8x16xf32>
    %cst_128 = arith.constant dense<0xFF800000> : vector<8xf32>
    %342 = vector.multi_reduction <maximumf>, %341, %cst_128 [1] : vector<8x16xf32> to vector<8xf32>
    %343 = vector.shape_cast %342 : vector<8xf32> to vector<8x1xf32>
    %344 = vector.broadcast %343 : vector<8x1xf32> to vector<8x16xf32>
    %345 = arith.subf %341, %344 : vector<8x16xf32>
    %346 = math.exp %345 : vector<8x16xf32>
    %cst_129 = arith.constant dense<0.000000e+00> : vector<8xf32>
    %347 = vector.multi_reduction <add>, %346, %cst_129 [1] : vector<8x16xf32> to vector<8xf32>
    %348 = vector.shape_cast %347 : vector<8xf32> to vector<8x1xf32>
    %349 = vector.broadcast %348 : vector<8x1xf32> to vector<8x16xf32>
    %350 = arith.divf %346, %349 : vector<8x16xf32>
    %cst_130 = arith.constant dense<0.000000e+00> : vector<8x64xf32>
    %351 = tpu.matmul %350, %337, %cst_130 {dimension_numbers = #tpu.dot_dimension_numbers<[1], [0], [0], [1], [0, 0, 1, 1], [], []>} : vector<8x16xf32>, vector<16x64xf32>, vector<8x64xf32> -> vector<8x64xf32>
    %352 = vector.extract_strided_slice %296 {offsets = [0, 192], sizes = [8, 64], strides = [1, 1]} : vector<8x256xf32> to vector<8x64xf32>
    %353 = vector.extract_strided_slice %298 {offsets = [0, 192], sizes = [16, 64], strides = [1, 1]} : vector<16x256xf32> to vector<16x64xf32>
    %354 = vector.extract_strided_slice %300 {offsets = [0, 192], sizes = [16, 64], strides = [1, 1]} : vector<16x256xf32> to vector<16x64xf32>
    %cst_131 = arith.constant dense<0.000000e+00> : vector<8x16xf32>
    %355 = tpu.matmul %352, %353, %cst_131 {dimension_numbers = #tpu.dot_dimension_numbers<[1], [1], [0], [0], [0, 0, 1, 0], [], []>} : vector<8x64xf32>, vector<16x64xf32>, vector<8x16xf32> -> vector<8x16xf32>
    %cst_132 = arith.constant 1.250000e-01 : f32
    %356 = vector.broadcast %cst_132 : f32 to vector<8x16xf32>
    %357 = arith.mulf %355, %356 : vector<8x16xf32>
    %358 = arith.addf %357, %5 : vector<8x16xf32>
    %cst_133 = arith.constant dense<0xFF800000> : vector<8xf32>
    %359 = vector.multi_reduction <maximumf>, %358, %cst_133 [1] : vector<8x16xf32> to vector<8xf32>
    %360 = vector.shape_cast %359 : vector<8xf32> to vector<8x1xf32>
    %361 = vector.broadcast %360 : vector<8x1xf32> to vector<8x16xf32>
    %362 = arith.subf %358, %361 : vector<8x16xf32>
    %363 = math.exp %362 : vector<8x16xf32>
    %cst_134 = arith.constant dense<0.000000e+00> : vector<8xf32>
    %364 = vector.multi_reduction <add>, %363, %cst_134 [1] : vector<8x16xf32> to vector<8xf32>
    %365 = vector.shape_cast %364 : vector<8xf32> to vector<8x1xf32>
    %366 = vector.broadcast %365 : vector<8x1xf32> to vector<8x16xf32>
    %367 = arith.divf %363, %366 : vector<8x16xf32>
    %cst_135 = arith.constant dense<0.000000e+00> : vector<8x64xf32>
    %368 = tpu.matmul %367, %354, %cst_135 {dimension_numbers = #tpu.dot_dimension_numbers<[1], [0], [0], [1], [0, 0, 1, 1], [], []>} : vector<8x16xf32>, vector<16x64xf32>, vector<8x64xf32> -> vector<8x64xf32>
    %369 = tpu.concatenate %317, %334, %351, %368 in 1 : vector<8x64xf32>, vector<8x64xf32>, vector<8x64xf32>, vector<8x64xf32> -> vector<8x256xf32>
    %c0_136 = arith.constant 0 : index
    %c0_137 = arith.constant 0 : index
    %370 = vector.load %arg10[%c0_136, %c0_137] : memref<256x64xf32, #tpu.memory_space<vmem>>, vector<256x64xf32>
    %cst_138 = arith.constant dense<0.000000e+00> : vector<8x64xf32>
    %371 = tpu.matmul %369, %370, %cst_138 {dimension_numbers = #tpu.dot_dimension_numbers<[1], [0], [0], [1], [0, 0, 1, 1], [], []>} : vector<8x256xf32>, vector<256x64xf32>, vector<8x64xf32> -> vector<8x64xf32>
    %cst_139 = arith.constant 0.000000e+00 : f32
    %372 = vector.broadcast %cst_139 : f32 to vector<8x64xf32>
    %373 = arith.subf %372, %371 : vector<8x64xf32>
    %374 = math.exp %373 : vector<8x64xf32>
    %375 = arith.mulf %294, %374 : vector<8x64xf32>
    %c0_140 = arith.constant 0 : index
    %c0_141 = arith.constant 0 : index
    %c0_142 = arith.constant 0 : index
    %376 = vector.load %arg11[%c0_140, %c0_141, %c0_142] : memref<1x8x64xf32, #tpu.memory_space<vmem>>, vector<1x8x64xf32>
    %377 = vector.shape_cast %376 : vector<1x8x64xf32> to vector<8x64xf32>
    %378 = vector.shape_cast %375 : vector<8x64xf32> to vector<1x8x64xf32>
    tpu.vector_store %arg11[%c0_140, %c0_141, %c0_142], %378 {strides = array<i32>} : memref<1x8x64xf32, #tpu.memory_space<vmem>>, vector<1x8x64xf32>,
    return
  }
  func.func @transform_0(%arg0: i32) -> (i32, i32, i32) {
    %c0_i32 = arith.constant 0 : i32
    %c0_i32_0 = arith.constant 0 : i32
    %c0_i32_1 = arith.constant 0 : i32
    return %arg0, %c0_i32, %c0_i32_0 : i32, i32, i32
  }
  func.func @transform_1(%arg0: i32) -> (i32, i32, i32) {
    %c0_i32 = arith.constant 0 : i32
    %c0_i32_0 = arith.constant 0 : i32
    %c0_i32_1 = arith.constant 0 : i32
    return %arg0, %c0_i32, %c0_i32_0 : i32, i32, i32
  }
  func.func @transform_2(%arg0: i32) -> (i32, i32, i32) {
    %c0_i32 = arith.constant 0 : i32
    %c0_i32_0 = arith.constant 0 : i32
    %c0_i32_1 = arith.constant 0 : i32
    return %arg0, %c0_i32, %c0_i32_0 : i32, i32, i32
  }
  func.func @transform_3(%arg0: i32) -> (i32, i32) {
    %c0_i32 = arith.constant 0 : i32
    %c0_i32_0 = arith.constant 0 : i32
    %c0_i32_1 = arith.constant 0 : i32
    return %c0_i32, %c0_i32_0 : i32, i32
  }
  func.func @transform_4(%arg0: i32) -> (i32, i32) {
    %c0_i32 = arith.constant 0 : i32
    %c0_i32_0 = arith.constant 0 : i32
    %c0_i32_1 = arith.constant 0 : i32
    return %c0_i32, %c0_i32_0 : i32, i32
  }
  func.func @transform_5(%arg0: i32) -> (i32, i32) {
    %c0_i32 = arith.constant 0 : i32
    %c0_i32_0 = arith.constant 0 : i32
    %c0_i32_1 = arith.constant 0 : i32
    return %c0_i32, %c0_i32_0 : i32, i32
  }
  func.func @transform_6(%arg0: i32) -> (i32, i32) {
    %c0_i32 = arith.constant 0 : i32
    %c0_i32_0 = arith.constant 0 : i32
    %c0_i32_1 = arith.constant 0 : i32
    return %c0_i32, %c0_i32_0 : i32, i32
  }
  func.func @transform_7(%arg0: i32) -> (i32, i32) {
    %c0_i32 = arith.constant 0 : i32
    %c0_i32_0 = arith.constant 0 : i32
    %c0_i32_1 = arith.constant 0 : i32
    return %c0_i32, %c0_i32_0 : i32, i32
  }
  func.func @transform_8(%arg0: i32) -> (i32, i32) {
    %c0_i32 = arith.constant 0 : i32
    %c0_i32_0 = arith.constant 0 : i32
    %c0_i32_1 = arith.constant 0 : i32
    return %c0_i32, %c0_i32_0 : i32, i32
  }
  func.func @transform_9(%arg0: i32) -> (i32, i32) {
    %c0_i32 = arith.constant 0 : i32
    %c0_i32_0 = arith.constant 0 : i32
    %c0_i32_1 = arith.constant 0 : i32
    return %c0_i32, %c0_i32_0 : i32, i32
  }
  func.func @transform_10(%arg0: i32) -> (i32, i32, i32) {
    %c0_i32 = arith.constant 0 : i32
    %c0_i32_0 = arith.constant 0 : i32
    %c0_i32_1 = arith.constant 0 : i32
    return %arg0, %c0_i32, %c0_i32_0 : i32, i32, i32
  }
}

</mosaic_0001>

<llo_original>
// kernel: short_term_encoder.1
$region0: #{short_term_encoder.1}
  #allocation0 [shape = 'u32[]', space=smem, size = 0x4, offset = 0x4, fixed_abs, tag = 'smem constant byte address 0x4 - core index']
  #allocation1 [shape = 'u32[72,128]{1,0:T(1,128)}', space=vmem, size = 0x9000, scoped, tag = 'internal scratch']
  #allocation2 [shape = 'f32[8,64]{1,0:T(8,128)}', space=vmem, size = 0x1000, scoped, tag = 'scratch operand']
  %s0 = inlined_call_operand.vmem [shape: f32[2,8,128], index: 0, kind: input, shape index: {}]
  %s1 = inlined_call_operand.vmem [shape: f32[2,16,64], index: 1, kind: input, shape index: {}]
  %s2 = inlined_call_operand.vmem [shape: f32[2,8,16], index: 2, kind: input, shape index: {}]
  %s3 = inlined_call_operand.vmem [shape: f32[128,256], index: 3, kind: input, shape index: {}]
  %s4 = inlined_call_operand.vmem [shape: f32[64,256], index: 4, kind: input, shape index: {}]
  %s5 = inlined_call_operand.vmem [shape: f32[1,256], index: 5, kind: input, shape index: {}]
  %s6 = inlined_call_operand.vmem [shape: f32[64,256], index: 6, kind: input, shape index: {}]
  %s7 = inlined_call_operand.vmem [shape: f32[64,256], index: 7, kind: input, shape index: {}]
  %s8 = inlined_call_operand.vmem [shape: f32[64,256], index: 8, kind: input, shape index: {}]
  %s9 = inlined_call_operand.vmem [shape: f32[256,64], index: 9, kind: input, shape index: {}]
  %s10 = inlined_call_operand.hbm [shape: f32[2,8,64], index: 10, kind: output, shape index: {}]
  %s11 = sld [smem:[#allocation0]]
  $region73: #{short_term_encoder.1} parent=0
    _
  %s13 = ssub.s32 1, %s11
  %s14 = scalar_select 0, %s13, %s11
  $region1: #{short_term_encoder.1} parent=0
    #allocation3 [shape = 'u8[8192]{0}', space=vmem, size = 0x2000, scoped, tag = 'output window, operand 0']
    #allocation4 [shape = 's32[2]{0}', space=sflag, size = 0x8, scoped, tag = 'scoped memory for short_term_encoder.1']
    %15 = vsyncpa [#allocation4], 0
    %s16 = scalar_lea.sflag [#allocation4], 1
    %17 = vsyncpa %s16, 0
    loop: start=0, step=1, limit=4
    $region2: #{short_term_encoder.1} parent=1 // loop_pre_header
      _
    $region3: #{short_term_encoder.1} parent=1 // loop_header
      %s19 = sphi 0, %s23
      %p20 = scmp.ge.s32.totalorder %s19, 4
      %s29 = sphi 0, %s31
      %s32 = sphi 0, %s29
      %s33 = sphi 0, %s32
      %s49 = sphi 0, %s33
      %s55 = sphi 0, %s57
      %s58 = sphi 0, %s55
      %s59 = sphi 0, %s58
      %s75 = sphi 0, %s59
      %s81 = sphi 0, %s83
      %s84 = sphi 0, %s81
      %s85 = sphi 0, %s84
      %s101 = sphi 0, %s85
      %s105 = sphi 0, %s105
      %s107 = sphi 0, %s105
      %s108 = sphi 0, %s107
      %s122 = sphi 0, %s108
      %s126 = sphi 0, %s126
      %s128 = sphi 0, %s126
      %s129 = sphi 0, %s128
      %s143 = sphi 0, %s129
      %s147 = sphi 0, %s147
      %s149 = sphi 0, %s147
      %s150 = sphi 0, %s149
      %s164 = sphi 0, %s150
      %s168 = sphi 0, %s168
      %s170 = sphi 0, %s168
      %s171 = sphi 0, %s170
      %s185 = sphi 0, %s171
      %s189 = sphi 0, %s189
      %s191 = sphi 0, %s189
      %s192 = sphi 0, %s191
      %s206 = sphi 0, %s192
      %s210 = sphi 0, %s210
      %s212 = sphi 0, %s210
      %s213 = sphi 0, %s212
      %s227 = sphi 0, %s213
      %s231 = sphi 0, %s231
      %s233 = sphi 0, %s231
      %s234 = sphi 0, %s233
      %s248 = sphi 0, %s234
      %s254 = sphi 0, %s256
      %s257 = sphi 0, %s254
      %s258 = sphi 0, %s257
      %s274 = sphi 0, %s258
    $region4: #{short_term_encoder.1} parent=1 // loop_header_branch
      %22 = sbr.rel (%p20) target = $region8
    $region5: #{short_term_encoder.1} parent=1 // loop_body
      %s24 = ssub.s32 %s19, 1
      %s25 = ssub.s32 %s19, 2
      %s26 = sadd.s32 %s19, 1
      %s27 = ssub.s32 %s19, %s26
      %p28 = scmp.eq.s32.totalorder %s27, 0
      %s30 = sadd.s32 %s29, 1
      %s31 = scalar_select %p28, %s29, %s30
      %p34 = pneg %p28
      %p35 = scmp.eq.s32.totalorder %s19, 1
      %p36 = por %p34, %p35
      %p37 = scmp.ne.s32.totalorder %s29, %s32
      %p38 = scmp.eq.s32.totalorder %s19, 0
      %p39 = por %p37, %p38
      %p40 = scmp.ne.s32.totalorder %s29, %s32
      %p41 = scmp.eq.s32.totalorder %s24, 1
      %p42 = por %p40, %p41
      %p43 = scmp.ne.s32.totalorder %s32, %s33
      %p44 = scmp.eq.s32.totalorder %s24, 0
      %p45 = por %p43, %p44
      %p46 = scmp.ne.s32.totalorder %s32, %s33
      %p47 = scmp.eq.s32.totalorder %s25, 1
      %p48 = por %p46, %p47
      %p50 = scmp.ne.s32.totalorder %s33, %s49
      %p51 = scmp.eq.s32.totalorder %s25, 0
      %p52 = por %p50, %p51
      %s53 = ssub.s32 %s19, %s26
      %p54 = scmp.eq.s32.totalorder %s53, 0
      %s56 = sadd.s32 %s55, 1
      %s57 = scalar_select %p54, %s55, %s56
      %p60 = pneg %p54
      %p61 = scmp.eq.s32.totalorder %s19, 1
      %p62 = por %p60, %p61
      %p63 = scmp.ne.s32.totalorder %s55, %s58
      %p64 = scmp.eq.s32.totalorder %s19, 0
      %p65 = por %p63, %p64
      %p66 = scmp.ne.s32.totalorder %s55, %s58
      %p67 = scmp.eq.s32.totalorder %s24, 1
      %p68 = por %p66, %p67
      %p69 = scmp.ne.s32.totalorder %s58, %s59
      %p70 = scmp.eq.s32.totalorder %s24, 0
      %p71 = por %p69, %p70
      %p72 = scmp.ne.s32.totalorder %s58, %s59
      %p73 = scmp.eq.s32.totalorder %s25, 1
      %p74 = por %p72, %p73
      %p76 = scmp.ne.s32.totalorder %s59, %s75
      %p77 = scmp.eq.s32.totalorder %s25, 0
      %p78 = por %p76, %p77
      %s79 = ssub.s32 %s19, %s26
      %p80 = scmp.eq.s32.totalorder %s79, 0
      %s82 = sadd.s32 %s81, 1
      %s83 = scalar_select %p80, %s81, %s82
      %p86 = pneg %p80
      %p87 = scmp.eq.s32.totalorder %s19, 1
      %p88 = por %p86, %p87
      %p89 = scmp.ne.s32.totalorder %s81, %s84
      %p90 = scmp.eq.s32.totalorder %s19, 0
      %p91 = por %p89, %p90
      %p92 = scmp.ne.s32.totalorder %s81, %s84
      %p93 = scmp.eq.s32.totalorder %s24, 1
      %p94 = por %p92, %p93
      %p95 = scmp.ne.s32.totalorder %s84, %s85
      %p96 = scmp.eq.s32.totalorder %s24, 0
      %p97 = por %p95, %p96
      %p98 = scmp.ne.s32.totalorder %s84, %s85
      %p99 = scmp.eq.s32.totalorder %s25, 1
      %p100 = por %p98, %p99
      %p102 = scmp.ne.s32.totalorder %s85, %s101
      %p103 = scmp.eq.s32.totalorder %s25, 0
      %p104 = por %p102, %p103
      %s106 = sadd.s32 %s105, 1
      %p109 = scmp.eq.s32.totalorder %s19, 1
      %p110 = scmp.ne.s32.totalorder %s105, %s107
      %p111 = scmp.eq.s32.totalorder %s19, 0
      %p112 = por %p110, %p111
      %p113 = scmp.ne.s32.totalorder %s105, %s107
      %p114 = scmp.eq.s32.totalorder %s24, 1
      %p115 = por %p113, %p114
      %p116 = scmp.ne.s32.totalorder %s107, %s108
      %p117 = scmp.eq.s32.totalorder %s24, 0
      %p118 = por %p116, %p117
      %p119 = scmp.ne.s32.totalorder %s107, %s108
      %p120 = scmp.eq.s32.totalorder %s25, 1
      %p121 = por %p119, %p120
      %p123 = scmp.ne.s32.totalorder %s108, %s122
      %p124 = scmp.eq.s32.totalorder %s25, 0
      %p125 = por %p123, %p124
      %s127 = sadd.s32 %s126, 1
      %p130 = scmp.eq.s32.totalorder %s19, 1
      %p131 = scmp.ne.s32.totalorder %s126, %s128
      %p132 = scmp.eq.s32.totalorder %s19, 0
      %p133 = por %p131, %p132
      %p134 = scmp.ne.s32.totalorder %s126, %s128
      %p135 = scmp.eq.s32.totalorder %s24, 1
      %p136 = por %p134, %p135
      %p137 = scmp.ne.s32.totalorder %s128, %s129
      %p138 = scmp.eq.s32.totalorder %s24, 0
      %p139 = por %p137, %p138
      %p140 = scmp.ne.s32.totalorder %s128, %s129
      %p141 = scmp.eq.s32.totalorder %s25, 1
      %p142 = por %p140, %p141
      %p144 = scmp.ne.s32.totalorder %s129, %s143
      %p145 = scmp.eq.s32.totalorder %s25, 0
      %p146 = por %p144, %p145
      %s148 = sadd.s32 %s147, 1
      %p151 = scmp.eq.s32.totalorder %s19, 1
      %p152 = scmp.ne.s32.totalorder %s147, %s149
      %p153 = scmp.eq.s32.totalorder %s19, 0
      %p154 = por %p152, %p153
      %p155 = scmp.ne.s32.totalorder %s147, %s149
      %p156 = scmp.eq.s32.totalorder %s24, 1
      %p157 = por %p155, %p156
      %p158 = scmp.ne.s32.totalorder %s149, %s150
      %p159 = scmp.eq.s32.totalorder %s24, 0
      %p160 = por %p158, %p159
      %p161 = scmp.ne.s32.totalorder %s149, %s150
      %p162 = scmp.eq.s32.totalorder %s25, 1
      %p163 = por %p161, %p162
      %p165 = scmp.ne.s32.totalorder %s150, %s164
      %p166 = scmp.eq.s32.totalorder %s25, 0
      %p167 = por %p165, %p166
      %s169 = sadd.s32 %s168, 1
      %p172 = scmp.eq.s32.totalorder %s19, 1
      %p173 = scmp.ne.s32.totalorder %s168, %s170
      %p174 = scmp.eq.s32.totalorder %s19, 0
      %p175 = por %p173, %p174
      %p176 = scmp.ne.s32.totalorder %s168, %s170
      %p177 = scmp.eq.s32.totalorder %s24, 1
      %p178 = por %p176, %p177
      %p179 = scmp.ne.s32.totalorder %s170, %s171
      %p180 = scmp.eq.s32.totalorder %s24, 0
      %p181 = por %p179, %p180
      %p182 = scmp.ne.s32.totalorder %s170, %s171
      %p183 = scmp.eq.s32.totalorder %s25, 1
      %p184 = por %p182, %p183
      %p186 = scmp.ne.s32.totalorder %s171, %s185
      %p187 = scmp.eq.s32.totalorder %s25, 0
      %p188 = por %p186, %p187
      %s190 = sadd.s32 %s189, 1
      %p193 = scmp.eq.s32.totalorder %s19, 1
      %p194 = scmp.ne.s32.totalorder %s189, %s191
      %p195 = scmp.eq.s32.totalorder %s19, 0
      %p196 = por %p194, %p195
      %p197 = scmp.ne.s32.totalorder %s189, %s191
      %p198 = scmp.eq.s32.totalorder %s24, 1
      %p199 = por %p197, %p198
      %p200 = scmp.ne.s32.totalorder %s191, %s192
      %p201 = scmp.eq.s32.totalorder %s24, 0
      %p202 = por %p200, %p201
      %p203 = scmp.ne.s32.totalorder %s191, %s192
      %p204 = scmp.eq.s32.totalorder %s25, 1
      %p205 = por %p203, %p204
      %p207 = scmp.ne.s32.totalorder %s192, %s206
      %p208 = scmp.eq.s32.totalorder %s25, 0
      %p209 = por %p207, %p208
      %s211 = sadd.s32 %s210, 1
      %p214 = scmp.eq.s32.totalorder %s19, 1
      %p215 = scmp.ne.s32.totalorder %s210, %s212
      %p216 = scmp.eq.s32.totalorder %s19, 0
      %p217 = por %p215, %p216
      %p218 = scmp.ne.s32.totalorder %s210, %s212
      %p219 = scmp.eq.s32.totalorder %s24, 1
      %p220 = por %p218, %p219
      %p221 = scmp.ne.s32.totalorder %s212, %s213
      %p222 = scmp.eq.s32.totalorder %s24, 0
      %p223 = por %p221, %p222
      %p224 = scmp.ne.s32.totalorder %s212, %s213
      %p225 = scmp.eq.s32.totalorder %s25, 1
      %p226 = por %p224, %p225
      %p228 = scmp.ne.s32.totalorder %s213, %s227
      %p229 = scmp.eq.s32.totalorder %s25, 0
      %p230 = por %p228, %p229
      %s232 = sadd.s32 %s231, 1
      %p235 = scmp.eq.s32.totalorder %s19, 1
      %p236 = scmp.ne.s32.totalorder %s231, %s233
      %p237 = scmp.eq.s32.totalorder %s19, 0
      %p238 = por %p236, %p237
      %p239 = scmp.ne.s32.totalorder %s231, %s233
      %p240 = scmp.eq.s32.totalorder %s24, 1
      %p241 = por %p239, %p240
      %p242 = scmp.ne.s32.totalorder %s233, %s234
      %p243 = scmp.eq.s32.totalorder %s24, 0
      %p244 = por %p242, %p243
      %p245 = scmp.ne.s32.totalorder %s233, %s234
      %p246 = scmp.eq.s32.totalorder %s25, 1
      %p247 = por %p245, %p246
      %p249 = scmp.ne.s32.totalorder %s234, %s248
      %p250 = scmp.eq.s32.totalorder %s25, 0
      %p251 = por %p249, %p250
      %s252 = ssub.s32 %s19, %s26
      %p253 = scmp.eq.s32.totalorder %s252, 0
      %s255 = sadd.s32 %s254, 1
      %s256 = scalar_select %p253, %s254, %s255
      %p259 = pneg %p253
      %p260 = scmp.eq.s32.totalorder %s19, 1
      %p261 = por %p259, %p260
      %p262 = scmp.ne.s32.totalorder %s254, %s257
      %p263 = scmp.eq.s32.totalorder %s19, 0
      %p264 = por %p262, %p263
      %p265 = scmp.ne.s32.totalorder %s254, %s257
      %p266 = scmp.eq.s32.totalorder %s24, 1
      %p267 = por %p265, %p266
      %p268 = scmp.ne.s32.totalorder %s257, %s258
      %p269 = scmp.eq.s32.totalorder %s24, 0
      %p270 = por %p268, %p269
      %p271 = scmp.ne.s32.totalorder %s257, %s258
      %p272 = scmp.eq.s32.totalorder %s25, 1
      %p273 = por %p271, %p272
      %p275 = scmp.ne.s32.totalorder %s258, %s274
      %p276 = scmp.eq.s32.totalorder %s25, 0
      %p277 = por %p275, %p276
      %p278 = scmp.le.s32.totalorder 1, %s19
      %p279 = scmp.lt.s32.totalorder %s19, 3
      %p280 = pnand %p278, %p279
      %p281 = pneg %p280
      // Predicated region
      $region9: #{short_term_encoder.1} parent=5 // pred_check
        _
      $region10: #{short_term_encoder.1} parent=5 // pred_check_branch
        %283 = sbr.rel (%p280) target = $region12
      $region11: #{short_term_encoder.1} parent=5 // pred_region
        %s284 = ssub.s32 %s19, 1
        // Predicated region
        $region13: #{short_term_encoder.1} parent=11 // pred_check
          %p285 = pneg %p118
        $region14: #{short_term_encoder.1} parent=11 // pred_check_branch
          %287 = sbr.rel (%p285) target = $region16
        $region15: #{short_term_encoder.1} parent=11 // pred_region
          _
        $region16: #{short_term_encoder.1} parent=11 // pred_fallthru
          _
        // Predicated region
        $region17: #{short_term_encoder.1} parent=11 // pred_check
          %p288 = pneg %p139
        $region18: #{short_term_encoder.1} parent=11 // pred_check_branch
          %290 = sbr.rel (%p288) target = $region20
        $region19: #{short_term_encoder.1} parent=11 // pred_region
          _
        $region20: #{short_term_encoder.1} parent=11 // pred_fallthru
          _
        // Predicated region
        $region21: #{short_term_encoder.1} parent=11 // pred_check
          %p291 = pneg %p160
        $region22: #{short_term_encoder.1} parent=11 // pred_check_branch
          %293 = sbr.rel (%p291) target = $region24
        $region23: #{short_term_encoder.1} parent=11 // pred_region
          _
        $region24: #{short_term_encoder.1} parent=11 // pred_fallthru
          _
        // Predicated region
        $region25: #{short_term_encoder.1} parent=11 // pred_check
          %p294 = pneg %p181
        $region26: #{short_term_encoder.1} parent=11 // pred_check_branch
          %296 = sbr.rel (%p294) target = $region28
        $region27: #{short_term_encoder.1} parent=11 // pred_region
          _
        $region28: #{short_term_encoder.1} parent=11 // pred_fallthru
          _
        // Predicated region
        $region29: #{short_term_encoder.1} parent=11 // pred_check
          %p297 = pneg %p202
        $region30: #{short_term_encoder.1} parent=11 // pred_check_branch
          %299 = sbr.rel (%p297) target = $region32
        $region31: #{short_term_encoder.1} parent=11 // pred_region
          _
        $region32: #{short_term_encoder.1} parent=11 // pred_fallthru
          _
        // Predicated region
        $region33: #{short_term_encoder.1} parent=11 // pred_check
          %p300 = pneg %p223
        $region34: #{short_term_encoder.1} parent=11 // pred_check_branch
          %302 = sbr.rel (%p300) target = $region36
        $region35: #{short_term_encoder.1} parent=11 // pred_region
          _
        $region36: #{short_term_encoder.1} parent=11 // pred_fallthru
          _
        // Predicated region
        $region37: #{short_term_encoder.1} parent=11 // pred_check
          %p303 = pneg %p244
        $region38: #{short_term_encoder.1} parent=11 // pred_check_branch
          %305 = sbr.rel (%p303) target = $region40
        $region39: #{short_term_encoder.1} parent=11 // pred_region
          _
        $region40: #{short_term_encoder.1} parent=11 // pred_fallthru
          _
      $region12: #{short_term_encoder.1} parent=5 // pred_fallthru
        _
      %p306 = scmp.lt.s32.totalorder %s19, 2
      // Predicated region
      $region41: #{short_term_encoder.1} parent=5 // pred_check
        %p307 = pneg %p306
      $region42: #{short_term_encoder.1} parent=5 // pred_check_branch
        %309 = sbr.rel (%p307) target = $region44
      $region43: #{short_term_encoder.1} parent=5 // pred_region
        // Predicated region
        $region45: #{short_term_encoder.1} parent=43 // pred_check
          %p310 = pneg %p39
        $region46: #{short_term_encoder.1} parent=43 // pred_check_branch
          %312 = sbr.rel (%p310) target = $region48
        $region47: #{short_term_encoder.1} parent=43 // pred_region
          %p313 = scmp.lt.s32.totalorder %s19, 1
          %s314 = scalar_select %p313, %s19, 1
          %s315 = smul.addr %s314, 8
          %s316 = scalar_lea.vmem %s0, %s315
        $region48: #{short_term_encoder.1} parent=43 // pred_fallthru
          _
        // Predicated region
        $region49: #{short_term_encoder.1} parent=43 // pred_check
          %p317 = pneg %p65
        $region50: #{short_term_encoder.1} parent=43 // pred_check_branch
          %319 = sbr.rel (%p317) target = $region52
        $region51: #{short_term_encoder.1} parent=43 // pred_region
          %p320 = scmp.lt.s32.totalorder %s19, 1
          %s321 = scalar_select %p320, %s19, 1
          %s322 = smul.addr %s321, 2
          %s323 = smul.addr %s322, 8
          %s324 = scalar_lea.vmem %s1, %s323
        $region52: #{short_term_encoder.1} parent=43 // pred_fallthru
          _
        // Predicated region
        $region53: #{short_term_encoder.1} parent=43 // pred_check
          %p325 = pneg %p91
        $region54: #{short_term_encoder.1} parent=43 // pred_check_branch
          %327 = sbr.rel (%p325) target = $region56
        $region55: #{short_term_encoder.1} parent=43 // pred_region
          %p328 = scmp.lt.s32.totalorder %s19, 1
          %s329 = scalar_select %p328, %s19, 1
          %s330 = smul.addr %s329, 8
          %s331 = scalar_lea.vmem %s2, %s330
        $region56: #{short_term_encoder.1} parent=43 // pred_fallthru
          _
      $region44: #{short_term_encoder.1} parent=5 // pred_fallthru
        _
      %p332 = scmp.le.s32.totalorder 1, %s19
      %p333 = scmp.lt.s32.totalorder %s19, 3
      %p334 = pnand %p332, %p333
      %p335 = pneg %p334
      // Predicated region
      $region57: #{short_term_encoder.1} parent=5 // pred_check
        _
      $region58: #{short_term_encoder.1} parent=5 // pred_check_branch
        %337 = sbr.rel (%p334) target = $region60
      $region59: #{short_term_encoder.1} parent=5 // pred_region
        %s338 = ssub.s32 %s19, 1
        %p339 = scmp.lt.s32.totalorder %s24, 1
        %s340 = scalar_select %p339, %s24, 1
        %s341 = smul.addr %s340, 8
        %s342 = scalar_lea.vmem %s0, %s341
        %p343 = pneg %p45
        %p344 = pneg %p42
        %p345 = scmp.lt.s32.totalorder %s24, 1
        %s346 = scalar_select %p345, %s24, 1
        %s347 = smul.addr %s346, 2
        %s348 = smul.addr %s347, 8
        %s349 = scalar_lea.vmem %s1, %s348
        %p350 = pneg %p71
        %p351 = pneg %p68
        %p352 = scmp.lt.s32.totalorder %s24, 1
        %s353 = scalar_select %p352, %s24, 1
        %s354 = smul.addr %s353, 8
        %s355 = scalar_lea.vmem %s2, %s354
        %p356 = pneg %p97
        %p357 = pneg %p94
        %p358 = pneg %p118
        %p359 = pneg %p115
        %p360 = pneg %p139
        %p361 = pneg %p136
        %p362 = pneg %p160
        %p363 = pneg %p157
        %p364 = pneg %p181
        %p365 = pneg %p178
        %p366 = pneg %p202
        %p367 = pneg %p199
        %p368 = pneg %p223
        %p369 = pneg %p220
        %p370 = pneg %p244
        %p371 = pneg %p241
        %p372 = pneg %p270
        %p373 = pneg %p267
        %s374 = sand.u32 %s257, 1
        %s375 = scalar_lea.sflag [#allocation4], %s374
        %s376 = sand.u32 %s257, 1
        %s377 = smul.addr %s376, 8
        %s378 = scalar_lea.vmem [#allocation3], %s377
        %p379 = scmp.lt.s32.totalorder %s24, 1
        %s380 = scalar_select %p379, %s24, 1
        %s381 = smul.addr %s380, 8
        %s382 = scalar_lea.vmem %s0, %s381
        %p383 = scmp.lt.s32.totalorder %s24, 1
        %s384 = scalar_select %p383, %s24, 1
        %s385 = smul.addr %s384, 2
        %s386 = smul.addr %s385, 8
        %s387 = scalar_lea.vmem %s1, %s386
        %p388 = scmp.lt.s32.totalorder %s24, 1
        %s389 = scalar_select %p388, %s24, 1
        %s390 = smul.addr %s389, 8
        %s391 = scalar_lea.vmem %s2, %s390
        %v392 = vld [vmem:[%s382] sm:$0xff]
        %v393 = vld [vmem:[%s387] sm:$0xff]
        %v394 = vld [vmem:[%s387 + $0x8] sm:$0xff]
        %v395 = vld [vmem:[%s391] sm:$0xff]
        %v396 = vld [vmem:[%s3] sm:$0xff]
        %v397 = vld [vmem:[%s3 + $0x8] sm:$0xff]
        %v398 = vld [vmem:[%s3 + $0x10] sm:$0xff]
        %v399 = vld [vmem:[%s3 + $0x18] sm:$0xff]
        %v400 = vld [vmem:[%s3 + $0x20] sm:$0xff]
        %v401 = vld [vmem:[%s3 + $0x28] sm:$0xff]
        %v402 = vld [vmem:[%s3 + $0x30] sm:$0xff]
        %v403 = vld [vmem:[%s3 + $0x38] sm:$0xff]
        %v404 = vld [vmem:[%s3 + $0x40] sm:$0xff]
        %v405 = vld [vmem:[%s3 + $0x48] sm:$0xff]
        %v406 = vld [vmem:[%s3 + $0x50] sm:$0xff]
        %v407 = vld [vmem:[%s3 + $0x58] sm:$0xff]
        %v408 = vld [vmem:[%s3 + $0x60] sm:$0xff]
        %v409 = vld [vmem:[%s3 + $0x68] sm:$0xff]
        %v410 = vld [vmem:[%s3 + $0x70] sm:$0xff]
        %v411 = vld [vmem:[%s3 + $0x78] sm:$0xff]
        %v412 = vld [vmem:[%s3 + $0x80] sm:$0xff]
        %v413 = vld [vmem:[%s3 + $0x88] sm:$0xff]
        %v414 = vld [vmem:[%s3 + $0x90] sm:$0xff]
        %v415 = vld [vmem:[%s3 + $0x98] sm:$0xff]
        %v416 = vld [vmem:[%s3 + $0xa0] sm:$0xff]
        %v417 = vld [vmem:[%s3 + $0xa8] sm:$0xff]
        %v418 = vld [vmem:[%s3 + $0xb0] sm:$0xff]
        %v419 = vld [vmem:[%s3 + $0xb8] sm:$0xff]
        %v420 = vld [vmem:[%s3 + $0xc0] sm:$0xff]
        %v421 = vld [vmem:[%s3 + $0xc8] sm:$0xff]
        %v422 = vld [vmem:[%s3 + $0xd0] sm:$0xff]
        %v423 = vld [vmem:[%s3 + $0xd8] sm:$0xff]
        %v424 = vld [vmem:[%s3 + $0xe0] sm:$0xff]
        %v425 = vld [vmem:[%s3 + $0xe8] sm:$0xff]
        %v426 = vld [vmem:[%s3 + $0xf0] sm:$0xff]
        %v427 = vld [vmem:[%s3 + $0xf8] sm:$0xff]
        %v428 = vld [vmem:[%s5] sm:$0x3]
        %v430 = vperm.slane %v428, 0
        %v431 = vperm.slane %v428, 1
        %434 = vmatpush.msra.mxu0 %v426
        %435 = vmatpush.msra.mxu0 %v424
        %436 = vmatpush.msra.mxu0 %v422
        %437 = vmatpush.msra.mxu0 %v420
        %438 = vmatpush.msra.mxu0 %v418
        %439 = vmatpush.msra.mxu0 %v416
        %440 = vmatpush.msra.mxu0 %v414
        %441 = vmatpush.msra.mxu0 %v412
        %442 = vmatpush.msra.mxu0 %v410
        %443 = vmatpush.msra.mxu0 %v408
        %444 = vmatpush.msra.mxu0 %v406
        %445 = vmatpush.msra.mxu0 %v404
        %446 = vmatpush.msra.mxu0 %v402
        %447 = vmatpush.msra.mxu0 %v400
        %448 = vmatpush.msra.mxu0 %v398
        %449 = vmatpush.msra.mxu0 %v396
        %450 = vmatmul.f32.gmra.mxu0 %v392
        %v451 = vpop.f32.mrf.mxu0
        %v452 = vadd.f32 %v430, %v451
        %453 = vdwg.mxu0
        %454 = vmatpush.msra.mxu0 %v427
        %455 = vmatpush.msra.mxu0 %v425
        %456 = vmatpush.msra.mxu0 %v423
        %457 = vmatpush.msra.mxu0 %v421
        %458 = vmatpush.msra.mxu0 %v419
        %459 = vmatpush.msra.mxu0 %v417
        %460 = vmatpush.msra.mxu0 %v415
        %461 = vmatpush.msra.mxu0 %v413
        %462 = vmatpush.msra.mxu0 %v411
        %463 = vmatpush.msra.mxu0 %v409
        %464 = vmatpush.msra.mxu0 %v407
        %465 = vmatpush.msra.mxu0 %v405
        %466 = vmatpush.msra.mxu0 %v403
        %467 = vmatpush.msra.mxu0 %v401
        %468 = vmatpush.msra.mxu0 %v399
        %469 = vmatpush.msra.mxu0 %v397
        %470 = vmatmul.f32.gmra.mxu0 %v392
        %v471 = vpop.f32.mrf.mxu0
        %v472 = vadd.f32 %v431, %v471
        %473 = vdwg.mxu0
        %v474 = vld [vmem:[%s4] sm:$0xff]
        %v475 = vld [vmem:[%s4 + $0x8] sm:$0xff]
        %v476 = vld [vmem:[%s4 + $0x10] sm:$0xff]
        %v477 = vld [vmem:[%s4 + $0x18] sm:$0xff]
        %v478 = vld [vmem:[%s4 + $0x20] sm:$0xff]
        %v479 = vld [vmem:[%s4 + $0x28] sm:$0xff]
        %v480 = vld [vmem:[%s4 + $0x30] sm:$0xff]
        %v481 = vld [vmem:[%s4 + $0x38] sm:$0xff]
        %v482 = vld [vmem:[%s4 + $0x40] sm:$0xff]
        %v483 = vld [vmem:[%s4 + $0x48] sm:$0xff]
        %v484 = vld [vmem:[%s4 + $0x50] sm:$0xff]
        %v485 = vld [vmem:[%s4 + $0x58] sm:$0xff]
        %v486 = vld [vmem:[%s4 + $0x60] sm:$0xff]
        %v487 = vld [vmem:[%s4 + $0x68] sm:$0xff]
        %v488 = vld [vmem:[%s4 + $0x70] sm:$0xff]
        %v489 = vld [vmem:[%s4 + $0x78] sm:$0xff]
        %vm490 = vcmask 523264
        %v492 = vsel %vm490, 0.0, 0
        %494 = vmatpush.msra.mxu0 0.0
        %495 = vmatpush.msra.mxu0 0.0
        %496 = vmatpush.msra.mxu0 0.0
        %497 = vmatpush.msra.mxu0 0.0
        %498 = vmatpush.msra.mxu0 0.0
        %499 = vmatpush.msra.mxu0 0.0
        %500 = vmatpush.msra.mxu0 0.0
        %501 = vmatpush.msra.mxu0 0.0
        %502 = vmatpush.msra.mxu0 %v488
        %503 = vmatpush.msra.mxu0 %v486
        %504 = vmatpush.msra.mxu0 %v484
        %505 = vmatpush.msra.mxu0 %v482
        %506 = vmatpush.msra.mxu0 %v480
        %507 = vmatpush.msra.mxu0 %v478
        %508 = vmatpush.msra.mxu0 %v476
        %509 = vmatpush.msra.mxu0 %v474
        %510 = vmatmul.f32.gmra.mxu0 %v492
        %v511 = vpop.f32.mrf.mxu0
        %v512 = vadd.f32 0.0, %v511
        %513 = vdwg.mxu0
        %514 = vmatpush.msra.mxu0 0.0
        %515 = vmatpush.msra.mxu0 0.0
        %516 = vmatpush.msra.mxu0 0.0
        %517 = vmatpush.msra.mxu0 0.0
        %518 = vmatpush.msra.mxu0 0.0
        %519 = vmatpush.msra.mxu0 0.0
        %520 = vmatpush.msra.mxu0 0.0
        %521 = vmatpush.msra.mxu0 0.0
        %522 = vmatpush.msra.mxu0 %v489
        %523 = vmatpush.msra.mxu0 %v487
        %524 = vmatpush.msra.mxu0 %v485
        %525 = vmatpush.msra.mxu0 %v483
        %526 = vmatpush.msra.mxu0 %v481
        %527 = vmatpush.msra.mxu0 %v479
        %528 = vmatpush.msra.mxu0 %v477
        %529 = vmatpush.msra.mxu0 %v475
        %530 = vmatmul.f32.gmra.mxu0 %v492
        %v531 = vpop.f32.mrf.mxu0
        %v532 = vadd.f32 0.0, %v531
        %533 = vdwg.mxu0
        %v534 = vadd.f32 %v452, %v512
        %v535 = vadd.f32 %v472, %v532
        %v536 = vsub.f32 0.0, %v534
        %v537 = vmul.f32 %v536, 1.442695
        %v538 = vpow.pop %v537
        %v539 = vadd.f32 %v538, 1.0
        %v540 = vrcp.pop %v539
        %v541 = vmul.f32 %v539, %v540
        %v542 = vsub.f32 1.0, %v541
        %v543 = vmul.f32 %v540, %v542
        %v544 = vadd.f32 %v540, %v543
        %vm545 = vweird.f32 %v539
        %vm546 = vweird.f32 %v540
        %vm547 = vmor %vm545, %vm546
        %v548 = vsel %vm547, %v540, %v544
        %v549 = vand.u32 2147483647, %v539
        %vm550 = vcmp.eq.f32.partialorder %v549, 8.507059e+37
        %v551 = vand.u32 %v539, 2147483648
        %v552 = vor.u32 1.1754944e-38, %v551
        %v553 = vsel %vm550, %v552, %v548
        %v554 = vmul.f32 1.0, %v553
        %v555 = vtanh.pop %v535
        %v556 = vsub.f32 0.0, %v535
        %v557 = vmul.f32 %v556, 1.442695
        %v558 = vpow.pop %v557
        %v559 = vadd.f32 %v558, 1.0
        %v560 = vrcp.pop %v559
        %v561 = vmul.f32 %v559, %v560
        %v562 = vsub.f32 1.0, %v561
        %v563 = vmul.f32 %v560, %v562
        %v564 = vadd.f32 %v560, %v563
        %vm565 = vweird.f32 %v559
        %vm566 = vweird.f32 %v560
        %vm567 = vmor %vm565, %vm566
        %v568 = vsel %vm567, %v560, %v564
        %v569 = vand.u32 2147483647, %v559
        %vm570 = vcmp.eq.f32.partialorder %v569, 8.507059e+37
        %v571 = vand.u32 %v559, 2147483648
        %v572 = vor.u32 1.1754944e-38, %v571
        %v573 = vsel %vm570, %v572, %v568
        %v574 = vmul.f32 1.0, %v573
        %v575 = vmul.f32 %v554, 0.0
        %v576 = vmul.f32 %v554, %v555
        %578 = vrot.lane.b32.xlu0 %v576, 64
        %v579 = vpop.permute.xlu0 %578
        %v581 = vadd.f32 %v575, %v579
        %v582 = vtanh.pop %v581
        %v583 = vmul.f32 %v574, %v582
        %585 = vrot.lane.b32.xlu0 %v583, 64
        %v586 = vpop.permute.xlu0 %585
        %vm588 = vcmask 516096
        %589 = vst.msk [vmem:[#allocation2] sm:$0x1] %vm588, %v586
        %v590 = vsel %vm490, %v586, 0
        %592 = vmatpush.msra.mxu0 0.0
        %593 = vmatpush.msra.mxu0 0.0
        %594 = vmatpush.msra.mxu0 0.0
        %595 = vmatpush.msra.mxu0 0.0
        %596 = vmatpush.msra.mxu0 0.0
        %597 = vmatpush.msra.mxu0 0.0
        %598 = vmatpush.msra.mxu0 0.0
        %599 = vmatpush.msra.mxu0 0.0
        %600 = vmatpush.msra.mxu0 %v488
        %601 = vmatpush.msra.mxu0 %v486
        %602 = vmatpush.msra.mxu0 %v484
        %603 = vmatpush.msra.mxu0 %v482
        %604 = vmatpush.msra.mxu0 %v480
        %605 = vmatpush.msra.mxu0 %v478
        %606 = vmatpush.msra.mxu0 %v476
        %607 = vmatpush.msra.mxu0 %v474
        %608 = vmatmul.f32.gmra.mxu0 %v590
        %v609 = vpop.f32.mrf.mxu0
        %v610 = vadd.f32 0.0, %v609
        %611 = vdwg.mxu0
        %612 = vmatpush.msra.mxu0 0.0
        %613 = vmatpush.msra.mxu0 0.0
        %614 = vmatpush.msra.mxu0 0.0
        %615 = vmatpush.msra.mxu0 0.0
        %616 = vmatpush.msra.mxu0 0.0
        %617 = vmatpush.msra.mxu0 0.0
        %618 = vmatpush.msra.mxu0 0.0
        %619 = vmatpush.msra.mxu0 0.0
        %620 = vmatpush.msra.mxu0 %v489
        %621 = vmatpush.msra.mxu0 %v487
        %622 = vmatpush.msra.mxu0 %v485
        %623 = vmatpush.msra.mxu0 %v483
        %624 = vmatpush.msra.mxu0 %v481
        %625 = vmatpush.msra.mxu0 %v479
        %626 = vmatpush.msra.mxu0 %v477
        %627 = vmatpush.msra.mxu0 %v475
        %628 = vmatmul.f32.gmra.mxu0 %v590
        %v629 = vpop.f32.mrf.mxu0
        %v630 = vadd.f32 0.0, %v629
        %631 = vdwg.mxu0
        %v634 = vrot.slane %v610, 7
        %v635 = vrot.slane %v630, 7
        %v638 = vadd.f32 %v452, %v634
        %v639 = vadd.f32 %v472, %v635
        %v640 = vsub.f32 0.0, %v638
        %v641 = vmul.f32 %v640, 1.442695
        %v642 = vpow.pop %v641
        %v643 = vadd.f32 %v642, 1.0
        %v644 = vrcp.pop %v643
        %v645 = vmul.f32 %v643, %v644
        %v646 = vsub.f32 1.0, %v645
        %v647 = vmul.f32 %v644, %v646
        %v648 = vadd.f32 %v644, %v647
        %vm649 = vweird.f32 %v643
        %vm650 = vweird.f32 %v644
        %vm651 = vmor %vm649, %vm650
        %v652 = vsel %vm651, %v644, %v648
        %v653 = vand.u32 2147483647, %v643
        %vm654 = vcmp.eq.f32.partialorder %v653, 8.507059e+37
        %v655 = vand.u32 %v643, 2147483648
        %v656 = vor.u32 1.1754944e-38, %v655
        %v657 = vsel %vm654, %v656, %v652
        %v658 = vmul.f32 1.0, %v657
        %v659 = vtanh.pop %v639
        %v660 = vsub.f32 0.0, %v639
        %v661 = vmul.f32 %v660, 1.442695
        %v662 = vpow.pop %v661
        %v663 = vadd.f32 %v662, 1.0
        %v664 = vrcp.pop %v663
        %v665 = vmul.f32 %v663, %v664
        %v666 = vsub.f32 1.0, %v665
        %v667 = vmul.f32 %v664, %v666
        %v668 = vadd.f32 %v664, %v667
        %vm669 = vweird.f32 %v663
        %vm670 = vweird.f32 %v664
        %vm671 = vmor %vm669, %vm670
        %v672 = vsel %vm671, %v664, %v668
        %v673 = vand.u32 2147483647, %v663
        %vm674 = vcmp.eq.f32.partialorder %v673, 8.507059e+37
        %v675 = vand.u32 %v663, 2147483648
        %v676 = vor.u32 1.1754944e-38, %v675
        %v677 = vsel %vm674, %v676, %v672
        %v678 = vmul.f32 1.0, %v677
        %v680 = vrot.slane %v581, 7
        %v682 = vmul.f32 %v658, %v680
        %v683 = vmul.f32 %v658, %v659
        %685 = vrot.lane.b32.xlu0 %v683, 64
        %v686 = vpop.permute.xlu0 %685
        %v688 = vadd.f32 %v682, %v686
        %v689 = vtanh.pop %v688
        %v690 = vmul.f32 %v678, %v689
        %692 = vrot.lane.b32.xlu0 %v690, 64
        %v693 = vpop.permute.xlu0 %692
        %vm695 = vcmask 517121
        %696 = vst.msk [vmem:[#allocation2] sm:$0x2] %vm695, %v693
        %v697 = vrot.slane %v690, 1
        %698 = vrot.lane.b32.xlu0 %v697, 64
        %v699 = vpop.permute.xlu0 %698
        %v700 = vsel %vm490, %v699, 0
        %702 = vmatpush.msra.mxu0 0.0
        %703 = vmatpush.msra.mxu0 0.0
        %704 = vmatpush.msra.mxu0 0.0
        %705 = vmatpush.msra.mxu0 0.0
        %706 = vmatpush.msra.mxu0 0.0
        %707 = vmatpush.msra.mxu0 0.0
        %708 = vmatpush.msra.mxu0 0.0
        %709 = vmatpush.msra.mxu0 0.0
        %710 = vmatpush.msra.mxu0 %v488
        %711 = vmatpush.msra.mxu0 %v486
        %712 = vmatpush.msra.mxu0 %v484
        %713 = vmatpush.msra.mxu0 %v482
        %714 = vmatpush.msra.mxu0 %v480
        %715 = vmatpush.msra.mxu0 %v478
        %716 = vmatpush.msra.mxu0 %v476
        %717 = vmatpush.msra.mxu0 %v474
        %718 = vmatmul.f32.gmra.mxu0 %v700
        %v719 = vpop.f32.mrf.mxu0
        %v720 = vadd.f32 0.0, %v719
        %721 = vdwg.mxu0
        %722 = vmatpush.msra.mxu0 0.0
        %723 = vmatpush.msra.mxu0 0.0
        %724 = vmatpush.msra.mxu0 0.0
        %725 = vmatpush.msra.mxu0 0.0
        %726 = vmatpush.msra.mxu0 0.0
        %727 = vmatpush.msra.mxu0 0.0
        %728 = vmatpush.msra.mxu0 0.0
        %729 = vmatpush.msra.mxu0 0.0
        %730 = vmatpush.msra.mxu0 %v489
        %731 = vmatpush.msra.mxu0 %v487
        %732 = vmatpush.msra.mxu0 %v485
        %733 = vmatpush.msra.mxu0 %v483
        %734 = vmatpush.msra.mxu0 %v481
        %735 = vmatpush.msra.mxu0 %v479
        %736 = vmatpush.msra.mxu0 %v477
        %737 = vmatpush.msra.mxu0 %v475
        %738 = vmatmul.f32.gmra.mxu0 %v700
        %v739 = vpop.f32.mrf.mxu0
        %v740 = vadd.f32 0.0, %v739
        %741 = vdwg.mxu0
        %v744 = vrot.slane %v720, 6
        %v745 = vrot.slane %v740, 6
        %v748 = vadd.f32 %v452, %v744
        %v749 = vadd.f32 %v472, %v745
        %v750 = vsub.f32 0.0, %v748
        %v751 = vmul.f32 %v750, 1.442695
        %v752 = vpow.pop %v751
        %v753 = vadd.f32 %v752, 1.0
        %v754 = vrcp.pop %v753
        %v755 = vmul.f32 %v753, %v754
        %v756 = vsub.f32 1.0, %v755
        %v757 = vmul.f32 %v754, %v756
        %v758 = vadd.f32 %v754, %v757
        %vm759 = vweird.f32 %v753
        %vm760 = vweird.f32 %v754
        %vm761 = vmor %vm759, %vm760
        %v762 = vsel %vm761, %v754, %v758
        %v763 = vand.u32 2147483647, %v753
        %vm764 = vcmp.eq.f32.partialorder %v763, 8.507059e+37
        %v765 = vand.u32 %v753, 2147483648
        %v766 = vor.u32 1.1754944e-38, %v765
        %v767 = vsel %vm764, %v766, %v762
        %v768 = vmul.f32 1.0, %v767
        %v769 = vtanh.pop %v749
        %v770 = vsub.f32 0.0, %v749
        %v771 = vmul.f32 %v770, 1.442695
        %v772 = vpow.pop %v771
        %v773 = vadd.f32 %v772, 1.0
        %v774 = vrcp.pop %v773
        %v775 = vmul.f32 %v773, %v774
        %v776 = vsub.f32 1.0, %v775
        %v777 = vmul.f32 %v774, %v776
        %v778 = vadd.f32 %v774, %v777
        %vm779 = vweird.f32 %v773
        %vm780 = vweird.f32 %v774
        %vm781 = vmor %vm779, %vm780
        %v782 = vsel %vm781, %v774, %v778
        %v783 = vand.u32 2147483647, %v773
        %vm784 = vcmp.eq.f32.partialorder %v783, 8.507059e+37
        %v785 = vand.u32 %v773, 2147483648
        %v786 = vor.u32 1.1754944e-38, %v785
        %v787 = vsel %vm784, %v786, %v782
        %v788 = vmul.f32 1.0, %v787
        %v790 = vrot.slane %v688, 7
        %v792 = vmul.f32 %v768, %v790
        %v793 = vmul.f32 %v768, %v769
        %795 = vrot.lane.b32.xlu0 %v793, 64
        %v796 = vpop.permute.xlu0 %795
        %v798 = vadd.f32 %v792, %v796
        %v799 = vtanh.pop %v798
        %v800 = vmul.f32 %v788, %v799
        %802 = vrot.lane.b32.xlu0 %v800, 64
        %v803 = vpop.permute.xlu0 %802
        %vm805 = vcmask 518146
        %806 = vst.msk [vmem:[#allocation2] sm:$0x4] %vm805, %v803
        %v807 = vrot.slane %v800, 2
        %808 = vrot.lane.b32.xlu0 %v807, 64
        %v809 = vpop.permute.xlu0 %808
        %v810 = vsel %vm490, %v809, 0
        %812 = vmatpush.msra.mxu0 0.0
        %813 = vmatpush.msra.mxu0 0.0
        %814 = vmatpush.msra.mxu0 0.0
        %815 = vmatpush.msra.mxu0 0.0
        %816 = vmatpush.msra.mxu0 0.0
        %817 = vmatpush.msra.mxu0 0.0
        %818 = vmatpush.msra.mxu0 0.0
        %819 = vmatpush.msra.mxu0 0.0
        %820 = vmatpush.msra.mxu0 %v488
        %821 = vmatpush.msra.mxu0 %v486
        %822 = vmatpush.msra.mxu0 %v484
        %823 = vmatpush.msra.mxu0 %v482
        %824 = vmatpush.msra.mxu0 %v480
        %825 = vmatpush.msra.mxu0 %v478
        %826 = vmatpush.msra.mxu0 %v476
        %827 = vmatpush.msra.mxu0 %v474
        %828 = vmatmul.f32.gmra.mxu0 %v810
        %v829 = vpop.f32.mrf.mxu0
        %v830 = vadd.f32 0.0, %v829
        %831 = vdwg.mxu0
        %832 = vmatpush.msra.mxu0 0.0
        %833 = vmatpush.msra.mxu0 0.0
        %834 = vmatpush.msra.mxu0 0.0
        %835 = vmatpush.msra.mxu0 0.0
        %836 = vmatpush.msra.mxu0 0.0
        %837 = vmatpush.msra.mxu0 0.0
        %838 = vmatpush.msra.mxu0 0.0
        %839 = vmatpush.msra.mxu0 0.0
        %840 = vmatpush.msra.mxu0 %v489
        %841 = vmatpush.msra.mxu0 %v487
        %842 = vmatpush.msra.mxu0 %v485
        %843 = vmatpush.msra.mxu0 %v483
        %844 = vmatpush.msra.mxu0 %v481
        %845 = vmatpush.msra.mxu0 %v479
        %846 = vmatpush.msra.mxu0 %v477
        %847 = vmatpush.msra.mxu0 %v475
        %848 = vmatmul.f32.gmra.mxu0 %v810
        %v849 = vpop.f32.mrf.mxu0
        %v850 = vadd.f32 0.0, %v849
        %851 = vdwg.mxu0
        %v854 = vrot.slane %v830, 5
        %v855 = vrot.slane %v850, 5
        %v858 = vadd.f32 %v452, %v854
        %v859 = vadd.f32 %v472, %v855
        %v860 = vsub.f32 0.0, %v858
        %v861 = vmul.f32 %v860, 1.442695
        %v862 = vpow.pop %v861
        %v863 = vadd.f32 %v862, 1.0
        %v864 = vrcp.pop %v863
        %v865 = vmul.f32 %v863, %v864
        %v866 = vsub.f32 1.0, %v865
        %v867 = vmul.f32 %v864, %v866
        %v868 = vadd.f32 %v864, %v867
        %vm869 = vweird.f32 %v863
        %vm870 = vweird.f32 %v864
        %vm871 = vmor %vm869, %vm870
        %v872 = vsel %vm871, %v864, %v868
        %v873 = vand.u32 2147483647, %v863
        %vm874 = vcmp.eq.f32.partialorder %v873, 8.507059e+37
        %v875 = vand.u32 %v863, 2147483648
        %v876 = vor.u32 1.1754944e-38, %v875
        %v877 = vsel %vm874, %v876, %v872
        %v878 = vmul.f32 1.0, %v877
        %v879 = vtanh.pop %v859
        %v880 = vsub.f32 0.0, %v859
        %v881 = vmul.f32 %v880, 1.442695
        %v882 = vpow.pop %v881
        %v883 = vadd.f32 %v882, 1.0
        %v884 = vrcp.pop %v883
        %v885 = vmul.f32 %v883, %v884
        %v886 = vsub.f32 1.0, %v885
        %v887 = vmul.f32 %v884, %v886
        %v888 = vadd.f32 %v884, %v887
        %vm889 = vweird.f32 %v883
        %vm890 = vweird.f32 %v884
        %vm891 = vmor %vm889, %vm890
        %v892 = vsel %vm891, %v884, %v888
        %v893 = vand.u32 2147483647, %v883
        %vm894 = vcmp.eq.f32.partialorder %v893, 8.507059e+37
        %v895 = vand.u32 %v883, 2147483648
        %v896 = vor.u32 1.1754944e-38, %v895
        %v897 = vsel %vm894, %v896, %v892
        %v898 = vmul.f32 1.0, %v897
        %v900 = vrot.slane %v798, 7
        %v902 = vmul.f32 %v878, %v900
        %v903 = vmul.f32 %v878, %v879
        %905 = vrot.lane.b32.xlu0 %v903, 64
        %v906 = vpop.permute.xlu0 %905
        %v908 = vadd.f32 %v902, %v906
        %v909 = vtanh.pop %v908
        %v910 = vmul.f32 %v898, %v909
        %912 = vrot.lane.b32.xlu0 %v910, 64
        %v913 = vpop.permute.xlu0 %912
        %vm915 = vcmask 519171
        %916 = vst.msk [vmem:[#allocation2] sm:$0x8] %vm915, %v913
        %v917 = vrot.slane %v910, 3
        %918 = vrot.lane.b32.xlu0 %v917, 64
        %v919 = vpop.permute.xlu0 %918
        %v920 = vsel %vm490, %v919, 0
        %922 = vmatpush.msra.mxu0 0.0
        %923 = vmatpush.msra.mxu0 0.0
        %924 = vmatpush.msra.mxu0 0.0
        %925 = vmatpush.msra.mxu0 0.0
        %926 = vmatpush.msra.mxu0 0.0
        %927 = vmatpush.msra.mxu0 0.0
        %928 = vmatpush.msra.mxu0 0.0
        %929 = vmatpush.msra.mxu0 0.0
        %930 = vmatpush.msra.mxu0 %v488
        %931 = vmatpush.msra.mxu0 %v486
        %932 = vmatpush.msra.mxu0 %v484
        %933 = vmatpush.msra.mxu0 %v482
        %934 = vmatpush.msra.mxu0 %v480
        %935 = vmatpush.msra.mxu0 %v478
        %936 = vmatpush.msra.mxu0 %v476
        %937 = vmatpush.msra.mxu0 %v474
        %938 = vmatmul.f32.gmra.mxu0 %v920
        %v939 = vpop.f32.mrf.mxu0
        %v940 = vadd.f32 0.0, %v939
        %941 = vdwg.mxu0
        %942 = vmatpush.msra.mxu0 0.0
        %943 = vmatpush.msra.mxu0 0.0
        %944 = vmatpush.msra.mxu0 0.0
        %945 = vmatpush.msra.mxu0 0.0
        %946 = vmatpush.msra.mxu0 0.0
        %947 = vmatpush.msra.mxu0 0.0
        %948 = vmatpush.msra.mxu0 0.0
        %949 = vmatpush.msra.mxu0 0.0
        %950 = vmatpush.msra.mxu0 %v489
        %951 = vmatpush.msra.mxu0 %v487
        %952 = vmatpush.msra.mxu0 %v485
        %953 = vmatpush.msra.mxu0 %v483
        %954 = vmatpush.msra.mxu0 %v481
        %955 = vmatpush.msra.mxu0 %v479
        %956 = vmatpush.msra.mxu0 %v477
        %957 = vmatpush.msra.mxu0 %v475
        %958 = vmatmul.f32.gmra.mxu0 %v920
        %v959 = vpop.f32.mrf.mxu0
        %v960 = vadd.f32 0.0, %v959
        %961 = vdwg.mxu0
        %v964 = vrot.slane %v940, 4
        %v965 = vrot.slane %v960, 4
        %v968 = vadd.f32 %v452, %v964
        %v969 = vadd.f32 %v472, %v965
        %v970 = vsub.f32 0.0, %v968
        %v971 = vmul.f32 %v970, 1.442695
        %v972 = vpow.pop %v971
        %v973 = vadd.f32 %v972, 1.0
        %v974 = vrcp.pop %v973
        %v975 = vmul.f32 %v973, %v974
        %v976 = vsub.f32 1.0, %v975
        %v977 = vmul.f32 %v974, %v976
        %v978 = vadd.f32 %v974, %v977
        %vm979 = vweird.f32 %v973
        %vm980 = vweird.f32 %v974
        %vm981 = vmor %vm979, %vm980
        %v982 = vsel %vm981, %v974, %v978
        %v983 = vand.u32 2147483647, %v973
        %vm984 = vcmp.eq.f32.partialorder %v983, 8.507059e+37
        %v985 = vand.u32 %v973, 2147483648
        %v986 = vor.u32 1.1754944e-38, %v985
        %v987 = vsel %vm984, %v986, %v982
        %v988 = vmul.f32 1.0, %v987
        %v989 = vtanh.pop %v969
        %v990 = vsub.f32 0.0, %v969
        %v991 = vmul.f32 %v990, 1.442695
        %v992 = vpow.pop %v991
        %v993 = vadd.f32 %v992, 1.0
        %v994 = vrcp.pop %v993
        %v995 = vmul.f32 %v993, %v994
        %v996 = vsub.f32 1.0, %v995
        %v997 = vmul.f32 %v994, %v996
        %v998 = vadd.f32 %v994, %v997
        %vm999 = vweird.f32 %v993
        %vm1000 = vweird.f32 %v994
        %vm1001 = vmor %vm999, %vm1000
        %v1002 = vsel %vm1001, %v994, %v998
        %v1003 = vand.u32 2147483647, %v993
        %vm1004 = vcmp.eq.f32.partialorder %v1003, 8.507059e+37
        %v1005 = vand.u32 %v993, 2147483648
        %v1006 = vor.u32 1.1754944e-38, %v1005
        %v1007 = vsel %vm1004, %v1006, %v1002
        %v1008 = vmul.f32 1.0, %v1007
        %v1010 = vrot.slane %v908, 7
        %v1012 = vmul.f32 %v988, %v1010
        %v1013 = vmul.f32 %v988, %v989
        %1015 = vrot.lane.b32.xlu0 %v1013, 64
        %v1016 = vpop.permute.xlu0 %1015
        %v1018 = vadd.f32 %v1012, %v1016
        %v1019 = vtanh.pop %v1018
        %v1020 = vmul.f32 %v1008, %v1019
        %1022 = vrot.lane.b32.xlu0 %v1020, 64
        %v1023 = vpop.permute.xlu0 %1022
        %vm1025 = vcmask 520196
        %1026 = vst.msk [vmem:[#allocation2] sm:$0x10] %vm1025, %v1023
        %v1027 = vrot.slane %v1020, 4
        %1028 = vrot.lane.b32.xlu0 %v1027, 64
        %v1029 = vpop.permute.xlu0 %1028
        %v1030 = vsel %vm490, %v1029, 0
        %1032 = vmatpush.msra.mxu0 0.0
        %1033 = vmatpush.msra.mxu0 0.0
        %1034 = vmatpush.msra.mxu0 0.0
        %1035 = vmatpush.msra.mxu0 0.0
        %1036 = vmatpush.msra.mxu0 0.0
        %1037 = vmatpush.msra.mxu0 0.0
        %1038 = vmatpush.msra.mxu0 0.0
        %1039 = vmatpush.msra.mxu0 0.0
        %1040 = vmatpush.msra.mxu0 %v488
        %1041 = vmatpush.msra.mxu0 %v486
        %1042 = vmatpush.msra.mxu0 %v484
        %1043 = vmatpush.msra.mxu0 %v482
        %1044 = vmatpush.msra.mxu0 %v480
        %1045 = vmatpush.msra.mxu0 %v478
        %1046 = vmatpush.msra.mxu0 %v476
        %1047 = vmatpush.msra.mxu0 %v474
        %1048 = vmatmul.f32.gmra.mxu0 %v1030
        %v1049 = vpop.f32.mrf.mxu0
        %v1050 = vadd.f32 0.0, %v1049
        %1051 = vdwg.mxu0
        %1052 = vmatpush.msra.mxu0 0.0
        %1053 = vmatpush.msra.mxu0 0.0
        %1054 = vmatpush.msra.mxu0 0.0
        %1055 = vmatpush.msra.mxu0 0.0
        %1056 = vmatpush.msra.mxu0 0.0
        %1057 = vmatpush.msra.mxu0 0.0
        %1058 = vmatpush.msra.mxu0 0.0
        %1059 = vmatpush.msra.mxu0 0.0
        %1060 = vmatpush.msra.mxu0 %v489
        %1061 = vmatpush.msra.mxu0 %v487
        %1062 = vmatpush.msra.mxu0 %v485
        %1063 = vmatpush.msra.mxu0 %v483
        %1064 = vmatpush.msra.mxu0 %v481
        %1065 = vmatpush.msra.mxu0 %v479
        %1066 = vmatpush.msra.mxu0 %v477
        %1067 = vmatpush.msra.mxu0 %v475
        %1068 = vmatmul.f32.gmra.mxu0 %v1030
        %v1069 = vpop.f32.mrf.mxu0
        %v1070 = vadd.f32 0.0, %v1069
        %1071 = vdwg.mxu0
        %v1074 = vrot.slane %v1050, 3
        %v1075 = vrot.slane %v1070, 3
        %v1078 = vadd.f32 %v452, %v1074
        %v1079 = vadd.f32 %v472, %v1075
        %v1080 = vsub.f32 0.0, %v1078
        %v1081 = vmul.f32 %v1080, 1.442695
        %v1082 = vpow.pop %v1081
        %v1083 = vadd.f32 %v1082, 1.0
        %v1084 = vrcp.pop %v1083
        %v1085 = vmul.f32 %v1083, %v1084
        %v1086 = vsub.f32 1.0, %v1085
        %v1087 = vmul.f32 %v1084, %v1086
        %v1088 = vadd.f32 %v1084, %v1087
        %vm1089 = vweird.f32 %v1083
        %vm1090 = vweird.f32 %v1084
        %vm1091 = vmor %vm1089, %vm1090
        %v1092 = vsel %vm1091, %v1084, %v1088
        %v1093 = vand.u32 2147483647, %v1083
        %vm1094 = vcmp.eq.f32.partialorder %v1093, 8.507059e+37
        %v1095 = vand.u32 %v1083, 2147483648
        %v1096 = vor.u32 1.1754944e-38, %v1095
        %v1097 = vsel %vm1094, %v1096, %v1092
        %v1098 = vmul.f32 1.0, %v1097
        %v1099 = vtanh.pop %v1079
        %v1100 = vsub.f32 0.0, %v1079
        %v1101 = vmul.f32 %v1100, 1.442695
        %v1102 = vpow.pop %v1101
        %v1103 = vadd.f32 %v1102, 1.0
        %v1104 = vrcp.pop %v1103
        %v1105 = vmul.f32 %v1103, %v1104
        %v1106 = vsub.f32 1.0, %v1105
        %v1107 = vmul.f32 %v1104, %v1106
        %v1108 = vadd.f32 %v1104, %v1107
        %vm1109 = vweird.f32 %v1103
        %vm1110 = vweird.f32 %v1104
        %vm1111 = vmor %vm1109, %vm1110
        %v1112 = vsel %vm1111, %v1104, %v1108
        %v1113 = vand.u32 2147483647, %v1103
        %vm1114 = vcmp.eq.f32.partialorder %v1113, 8.507059e+37
        %v1115 = vand.u32 %v1103, 2147483648
        %v1116 = vor.u32 1.1754944e-38, %v1115
        %v1117 = vsel %vm1114, %v1116, %v1112
        %v1118 = vmul.f32 1.0, %v1117
        %v1120 = vrot.slane %v1018, 7
        %v1122 = vmul.f32 %v1098, %v1120
        %v1123 = vmul.f32 %v1098, %v1099
        %1125 = vrot.lane.b32.xlu0 %v1123, 64
        %v1126 = vpop.permute.xlu0 %1125
        %v1128 = vadd.f32 %v1122, %v1126
        %v1129 = vtanh.pop %v1128
        %v1130 = vmul.f32 %v1118, %v1129
        %1132 = vrot.lane.b32.xlu0 %v1130, 64
        %v1133 = vpop.permute.xlu0 %1132
        %vm1135 = vcmask 521221
        %1136 = vst.msk [vmem:[#allocation2] sm:$0x20] %vm1135, %v1133
        %v1137 = vrot.slane %v1130, 5
        %1138 = vrot.lane.b32.xlu0 %v1137, 64
        %v1139 = vpop.permute.xlu0 %1138
        %v1140 = vsel %vm490, %v1139, 0
        %1142 = vmatpush.msra.mxu0 0.0
        %1143 = vmatpush.msra.mxu0 0.0
        %1144 = vmatpush.msra.mxu0 0.0
        %1145 = vmatpush.msra.mxu0 0.0
        %1146 = vmatpush.msra.mxu0 0.0
        %1147 = vmatpush.msra.mxu0 0.0
        %1148 = vmatpush.msra.mxu0 0.0
        %1149 = vmatpush.msra.mxu0 0.0
        %1150 = vmatpush.msra.mxu0 %v488
        %1151 = vmatpush.msra.mxu0 %v486
        %1152 = vmatpush.msra.mxu0 %v484
        %1153 = vmatpush.msra.mxu0 %v482
        %1154 = vmatpush.msra.mxu0 %v480
        %1155 = vmatpush.msra.mxu0 %v478
        %1156 = vmatpush.msra.mxu0 %v476
        %1157 = vmatpush.msra.mxu0 %v474
        %1158 = vmatmul.f32.gmra.mxu0 %v1140
        %v1159 = vpop.f32.mrf.mxu0
        %v1160 = vadd.f32 0.0, %v1159
        %1161 = vdwg.mxu0
        %1162 = vmatpush.msra.mxu0 0.0
        %1163 = vmatpush.msra.mxu0 0.0
        %1164 = vmatpush.msra.mxu0 0.0
        %1165 = vmatpush.msra.mxu0 0.0
        %1166 = vmatpush.msra.mxu0 0.0
        %1167 = vmatpush.msra.mxu0 0.0
        %1168 = vmatpush.msra.mxu0 0.0
        %1169 = vmatpush.msra.mxu0 0.0
        %1170 = vmatpush.msra.mxu0 %v489
        %1171 = vmatpush.msra.mxu0 %v487
        %1172 = vmatpush.msra.mxu0 %v485
        %1173 = vmatpush.msra.mxu0 %v483
        %1174 = vmatpush.msra.mxu0 %v481
        %1175 = vmatpush.msra.mxu0 %v479
        %1176 = vmatpush.msra.mxu0 %v477
        %1177 = vmatpush.msra.mxu0 %v475
        %1178 = vmatmul.f32.gmra.mxu0 %v1140
        %v1179 = vpop.f32.mrf.mxu0
        %v1180 = vadd.f32 0.0, %v1179
        %1181 = vdwg.mxu0
        %v1184 = vrot.slane %v1160, 2
        %v1185 = vrot.slane %v1180, 2
        %v1188 = vadd.f32 %v452, %v1184
        %v1189 = vadd.f32 %v472, %v1185
        %v1190 = vsub.f32 0.0, %v1188
        %v1191 = vmul.f32 %v1190, 1.442695
        %v1192 = vpow.pop %v1191
        %v1193 = vadd.f32 %v1192, 1.0
        %v1194 = vrcp.pop %v1193
        %v1195 = vmul.f32 %v1193, %v1194
        %v1196 = vsub.f32 1.0, %v1195
        %v1197 = vmul.f32 %v1194, %v1196
        %v1198 = vadd.f32 %v1194, %v1197
        %vm1199 = vweird.f32 %v1193
        %vm1200 = vweird.f32 %v1194
        %vm1201 = vmor %vm1199, %vm1200
        %v1202 = vsel %vm1201, %v1194, %v1198
        %v1203 = vand.u32 2147483647, %v1193
        %vm1204 = vcmp.eq.f32.partialorder %v1203, 8.507059e+37
        %v1205 = vand.u32 %v1193, 2147483648
        %v1206 = vor.u32 1.1754944e-38, %v1205
        %v1207 = vsel %vm1204, %v1206, %v1202
        %v1208 = vmul.f32 1.0, %v1207
        %v1209 = vtanh.pop %v1189
        %v1210 = vsub.f32 0.0, %v1189
        %v1211 = vmul.f32 %v1210, 1.442695
        %v1212 = vpow.pop %v1211
        %v1213 = vadd.f32 %v1212, 1.0
        %v1214 = vrcp.pop %v1213
        %v1215 = vmul.f32 %v1213, %v1214
        %v1216 = vsub.f32 1.0, %v1215
        %v1217 = vmul.f32 %v1214, %v1216
        %v1218 = vadd.f32 %v1214, %v1217
        %vm1219 = vweird.f32 %v1213
        %vm1220 = vweird.f32 %v1214
        %vm1221 = vmor %vm1219, %vm1220
        %v1222 = vsel %vm1221, %v1214, %v1218
        %v1223 = vand.u32 2147483647, %v1213
        %vm1224 = vcmp.eq.f32.partialorder %v1223, 8.507059e+37
        %v1225 = vand.u32 %v1213, 2147483648
        %v1226 = vor.u32 1.1754944e-38, %v1225
        %v1227 = vsel %vm1224, %v1226, %v1222
        %v1228 = vmul.f32 1.0, %v1227
        %v1230 = vrot.slane %v1128, 7
        %v1232 = vmul.f32 %v1208, %v1230
        %v1233 = vmul.f32 %v1208, %v1209
        %1235 = vrot.lane.b32.xlu0 %v1233, 64
        %v1236 = vpop.permute.xlu0 %1235
        %v1238 = vadd.f32 %v1232, %v1236
        %v1239 = vtanh.pop %v1238
        %v1240 = vmul.f32 %v1228, %v1239
        %1242 = vrot.lane.b32.xlu0 %v1240, 64
        %v1243 = vpop.permute.xlu0 %1242
        %vm1245 = vcmask 522246
        %1246 = vst.msk [vmem:[#allocation2] sm:$0x40] %vm1245, %v1243
        %v1247 = vrot.slane %v1240, 6
        %1248 = vrot.lane.b32.xlu0 %v1247, 64
        %v1249 = vpop.permute.xlu0 %1248
        %v1250 = vsel %vm490, %v1249, 0
        %1252 = vmatpush.msra.mxu0 0.0
        %1253 = vmatpush.msra.mxu0 0.0
        %1254 = vmatpush.msra.mxu0 0.0
        %1255 = vmatpush.msra.mxu0 0.0
        %1256 = vmatpush.msra.mxu0 0.0
        %1257 = vmatpush.msra.mxu0 0.0
        %1258 = vmatpush.msra.mxu0 0.0
        %1259 = vmatpush.msra.mxu0 0.0
        %1260 = vmatpush.msra.mxu0 %v488
        %1261 = vmatpush.msra.mxu0 %v486
        %1262 = vmatpush.msra.mxu0 %v484
        %1263 = vmatpush.msra.mxu0 %v482
        %1264 = vmatpush.msra.mxu0 %v480
        %1265 = vmatpush.msra.mxu0 %v478
        %1266 = vmatpush.msra.mxu0 %v476
        %1267 = vmatpush.msra.mxu0 %v474
        %1268 = vmatmul.f32.gmra.mxu0 %v1250
        %v1269 = vpop.f32.mrf.mxu0
        %v1270 = vadd.f32 0.0, %v1269
        %1271 = vdwg.mxu0
        %1272 = vmatpush.msra.mxu0 0.0
        %1273 = vmatpush.msra.mxu0 0.0
        %1274 = vmatpush.msra.mxu0 0.0
        %1275 = vmatpush.msra.mxu0 0.0
        %1276 = vmatpush.msra.mxu0 0.0
        %1277 = vmatpush.msra.mxu0 0.0
        %1278 = vmatpush.msra.mxu0 0.0
        %1279 = vmatpush.msra.mxu0 0.0
        %1280 = vmatpush.msra.mxu0 %v489
        %1281 = vmatpush.msra.mxu0 %v487
        %1282 = vmatpush.msra.mxu0 %v485
        %1283 = vmatpush.msra.mxu0 %v483
        %1284 = vmatpush.msra.mxu0 %v481
        %1285 = vmatpush.msra.mxu0 %v479
        %1286 = vmatpush.msra.mxu0 %v477
        %1287 = vmatpush.msra.mxu0 %v475
        %1288 = vmatmul.f32.gmra.mxu0 %v1250
        %v1289 = vpop.f32.mrf.mxu0
        %v1290 = vadd.f32 0.0, %v1289
        %1291 = vdwg.mxu0
        %v1294 = vrot.slane %v1270, 1
        %v1295 = vrot.slane %v1290, 1
        %v1298 = vadd.f32 %v452, %v1294
        %v1299 = vadd.f32 %v472, %v1295
        %v1300 = vsub.f32 0.0, %v1298
        %v1301 = vmul.f32 %v1300, 1.442695
        %v1302 = vpow.pop %v1301
        %v1303 = vadd.f32 %v1302, 1.0
        %v1304 = vrcp.pop %v1303
        %v1305 = vmul.f32 %v1303, %v1304
        %v1306 = vsub.f32 1.0, %v1305
        %v1307 = vmul.f32 %v1304, %v1306
        %v1308 = vadd.f32 %v1304, %v1307
        %vm1309 = vweird.f32 %v1303
        %vm1310 = vweird.f32 %v1304
        %vm1311 = vmor %vm1309, %vm1310
        %v1312 = vsel %vm1311, %v1304, %v1308
        %v1313 = vand.u32 2147483647, %v1303
        %vm1314 = vcmp.eq.f32.partialorder %v1313, 8.507059e+37
        %v1315 = vand.u32 %v1303, 2147483648
        %v1316 = vor.u32 1.1754944e-38, %v1315
        %v1317 = vsel %vm1314, %v1316, %v1312
        %v1318 = vmul.f32 1.0, %v1317
        %v1319 = vtanh.pop %v1299
        %v1320 = vsub.f32 0.0, %v1299
        %v1321 = vmul.f32 %v1320, 1.442695
        %v1322 = vpow.pop %v1321
        %v1323 = vadd.f32 %v1322, 1.0
        %v1324 = vrcp.pop %v1323
        %v1325 = vmul.f32 %v1323, %v1324
        %v1326 = vsub.f32 1.0, %v1325
        %v1327 = vmul.f32 %v1324, %v1326
        %v1328 = vadd.f32 %v1324, %v1327
        %vm1329 = vweird.f32 %v1323
        %vm1330 = vweird.f32 %v1324
        %vm1331 = vmor %vm1329, %vm1330
        %v1332 = vsel %vm1331, %v1324, %v1328
        %v1333 = vand.u32 2147483647, %v1323
        %vm1334 = vcmp.eq.f32.partialorder %v1333, 8.507059e+37
        %v1335 = vand.u32 %v1323, 2147483648
        %v1336 = vor.u32 1.1754944e-38, %v1335
        %v1337 = vsel %vm1334, %v1336, %v1332
        %v1338 = vmul.f32 1.0, %v1337
        %v1340 = vrot.slane %v1238, 7
        %v1342 = vmul.f32 %v1318, %v1340
        %v1343 = vmul.f32 %v1318, %v1319
        %1345 = vrot.lane.b32.xlu0 %v1343, 64
        %v1346 = vpop.permute.xlu0 %1345
        %v1348 = vadd.f32 %v1342, %v1346
        %v1349 = vtanh.pop %v1348
        %v1350 = vmul.f32 %v1338, %v1349
        %1352 = vrot.lane.b32.xlu0 %v1350, 64
        %v1353 = vpop.permute.xlu0 %1352
        %vm1355 = vcmask 523271
        %1356 = vst.msk [vmem:[#allocation2] sm:$0x80] %vm1355, %v1353
        %v1357 = vld [vmem:[#allocation2] sm:$0xff]
        %v1358 = vld [vmem:[%s6] sm:$0xff]
        %v1359 = vld [vmem:[%s6 + $0x8] sm:$0xff]
        %v1360 = vld [vmem:[%s6 + $0x10] sm:$0xff]
        %v1361 = vld [vmem:[%s6 + $0x18] sm:$0xff]
        %v1362 = vld [vmem:[%s6 + $0x20] sm:$0xff]
        %v1363 = vld [vmem:[%s6 + $0x28] sm:$0xff]
        %v1364 = vld [vmem:[%s6 + $0x30] sm:$0xff]
        %v1365 = vld [vmem:[%s6 + $0x38] sm:$0xff]
        %v1366 = vld [vmem:[%s6 + $0x40] sm:$0xff]
        %v1367 = vld [vmem:[%s6 + $0x48] sm:$0xff]
        %v1368 = vld [vmem:[%s6 + $0x50] sm:$0xff]
        %v1369 = vld [vmem:[%s6 + $0x58] sm:$0xff]
        %v1370 = vld [vmem:[%s6 + $0x60] sm:$0xff]
        %v1371 = vld [vmem:[%s6 + $0x68] sm:$0xff]
        %v1372 = vld [vmem:[%s6 + $0x70] sm:$0xff]
        %v1373 = vld [vmem:[%s6 + $0x78] sm:$0xff]
        %v1375 = vsel %vm490, %v1357, 0
        %1377 = vmatpush.msra.mxu0 0.0
        %1378 = vmatpush.msra.mxu0 0.0
        %1379 = vmatpush.msra.mxu0 0.0
        %1380 = vmatpush.msra.mxu0 0.0
        %1381 = vmatpush.msra.mxu0 0.0
        %1382 = vmatpush.msra.mxu0 0.0
        %1383 = vmatpush.msra.mxu0 0.0
        %1384 = vmatpush.msra.mxu0 0.0
        %1385 = vmatpush.msra.mxu0 %v1372
        %1386 = vmatpush.msra.mxu0 %v1370
        %1387 = vmatpush.msra.mxu0 %v1368
        %1388 = vmatpush.msra.mxu0 %v1366
        %1389 = vmatpush.msra.mxu0 %v1364
        %1390 = vmatpush.msra.mxu0 %v1362
        %1391 = vmatpush.msra.mxu0 %v1360
        %1392 = vmatpush.msra.mxu0 %v1358
        %1393 = vmatmul.f32.gmra.mxu0 %v1375
        %v1394 = vpop.f32.mrf.mxu0
        %v1395 = vadd.f32 0.0, %v1394
        %1396 = vdwg.mxu0
        %1397 = vmatpush.msra.mxu0 0.0
        %1398 = vmatpush.msra.mxu0 0.0
        %1399 = vmatpush.msra.mxu0 0.0
        %1400 = vmatpush.msra.mxu0 0.0
        %1401 = vmatpush.msra.mxu0 0.0
        %1402 = vmatpush.msra.mxu0 0.0
        %1403 = vmatpush.msra.mxu0 0.0
        %1404 = vmatpush.msra.mxu0 0.0
        %1405 = vmatpush.msra.mxu0 %v1373
        %1406 = vmatpush.msra.mxu0 %v1371
        %1407 = vmatpush.msra.mxu0 %v1369
        %1408 = vmatpush.msra.mxu0 %v1367
        %1409 = vmatpush.msra.mxu0 %v1365
        %1410 = vmatpush.msra.mxu0 %v1363
        %1411 = vmatpush.msra.mxu0 %v1361
        %1412 = vmatpush.msra.mxu0 %v1359
        %1413 = vmatmul.f32.gmra.mxu0 %v1375
        %v1414 = vpop.f32.mrf.mxu0
        %v1415 = vadd.f32 0.0, %v1414
        %1416 = vdwg.mxu0
        %v1417 = vld [vmem:[%s7] sm:$0xff]
        %v1418 = vld [vmem:[%s7 + $0x8] sm:$0xff]
        %v1419 = vld [vmem:[%s7 + $0x10] sm:$0xff]
        %v1420 = vld [vmem:[%s7 + $0x18] sm:$0xff]
        %v1421 = vld [vmem:[%s7 + $0x20] sm:$0xff]
        %v1422 = vld [vmem:[%s7 + $0x28] sm:$0xff]
        %v1423 = vld [vmem:[%s7 + $0x30] sm:$0xff]
        %v1424 = vld [vmem:[%s7 + $0x38] sm:$0xff]
        %v1425 = vld [vmem:[%s7 + $0x40] sm:$0xff]
        %v1426 = vld [vmem:[%s7 + $0x48] sm:$0xff]
        %v1427 = vld [vmem:[%s7 + $0x50] sm:$0xff]
        %v1428 = vld [vmem:[%s7 + $0x58] sm:$0xff]
        %v1429 = vld [vmem:[%s7 + $0x60] sm:$0xff]
        %v1430 = vld [vmem:[%s7 + $0x68] sm:$0xff]
        %v1431 = vld [vmem:[%s7 + $0x70] sm:$0xff]
        %v1432 = vld [vmem:[%s7 + $0x78] sm:$0xff]
        %v1434 = vsel %vm490, %v393, 0
        %v1437 = vsel %vm490, %v394, 0
        %1439 = vmatpush.msra.mxu0 0.0
        %1440 = vmatpush.msra.mxu0 0.0
        %1441 = vmatpush.msra.mxu0 0.0
        %1442 = vmatpush.msra.mxu0 0.0
        %1443 = vmatpush.msra.mxu0 0.0
        %1444 = vmatpush.msra.mxu0 0.0
        %1445 = vmatpush.msra.mxu0 0.0
        %1446 = vmatpush.msra.mxu0 0.0
        %1447 = vmatpush.msra.mxu0 %v1431
        %1448 = vmatpush.msra.mxu0 %v1429
        %1449 = vmatpush.msra.mxu0 %v1427
        %1450 = vmatpush.msra.mxu0 %v1425
        %1451 = vmatpush.msra.mxu0 %v1423
        %1452 = vmatpush.msra.mxu0 %v1421
        %1453 = vmatpush.msra.mxu0 %v1419
        %1454 = vmatpush.msra.mxu0 %v1417
        %1455 = vmatmul.f32.gmra.mxu0 %v1434
        %v1456 = vpop.f32.mrf.mxu0
        %v1457 = vadd.f32 0.0, %v1456
        %1458 = vmatmul.f32.gmra.mxu0 %v1437
        %v1459 = vpop.f32.mrf.mxu0
        %v1460 = vadd.f32 0.0, %v1459
        %1461 = vdwg.mxu0
        %1462 = vmatpush.msra.mxu0 0.0
        %1463 = vmatpush.msra.mxu0 0.0
        %1464 = vmatpush.msra.mxu0 0.0
        %1465 = vmatpush.msra.mxu0 0.0
        %1466 = vmatpush.msra.mxu0 0.0
        %1467 = vmatpush.msra.mxu0 0.0
        %1468 = vmatpush.msra.mxu0 0.0
        %1469 = vmatpush.msra.mxu0 0.0
        %1470 = vmatpush.msra.mxu0 %v1432
        %1471 = vmatpush.msra.mxu0 %v1430
        %1472 = vmatpush.msra.mxu0 %v1428
        %1473 = vmatpush.msra.mxu0 %v1426
        %1474 = vmatpush.msra.mxu0 %v1424
        %1475 = vmatpush.msra.mxu0 %v1422
        %1476 = vmatpush.msra.mxu0 %v1420
        %1477 = vmatpush.msra.mxu0 %v1418
        %1478 = vmatmul.f32.gmra.mxu0 %v1434
        %v1479 = vpop.f32.mrf.mxu0
        %v1480 = vadd.f32 0.0, %v1479
        %1481 = vmatmul.f32.gmra.mxu0 %v1437
        %v1482 = vpop.f32.mrf.mxu0
        %v1483 = vadd.f32 0.0, %v1482
        %1484 = vdwg.mxu0
        %v1485 = vld [vmem:[%s8] sm:$0xff]
        %v1486 = vld [vmem:[%s8 + $0x8] sm:$0xff]
        %v1487 = vld [vmem:[%s8 + $0x10] sm:$0xff]
        %v1488 = vld [vmem:[%s8 + $0x18] sm:$0xff]
        %v1489 = vld [vmem:[%s8 + $0x20] sm:$0xff]
        %v1490 = vld [vmem:[%s8 + $0x28] sm:$0xff]
        %v1491 = vld [vmem:[%s8 + $0x30] sm:$0xff]
        %v1492 = vld [vmem:[%s8 + $0x38] sm:$0xff]
        %v1493 = vld [vmem:[%s8 + $0x40] sm:$0xff]
        %v1494 = vld [vmem:[%s8 + $0x48] sm:$0xff]
        %v1495 = vld [vmem:[%s8 + $0x50] sm:$0xff]
        %v1496 = vld [vmem:[%s8 + $0x58] sm:$0xff]
        %v1497 = vld [vmem:[%s8 + $0x60] sm:$0xff]
        %v1498 = vld [vmem:[%s8 + $0x68] sm:$0xff]
        %v1499 = vld [vmem:[%s8 + $0x70] sm:$0xff]
        %v1500 = vld [vmem:[%s8 + $0x78] sm:$0xff]
        %1501 = vmatpush.msra.mxu0 0.0
        %1502 = vmatpush.msra.mxu0 0.0
        %1503 = vmatpush.msra.mxu0 0.0
        %1504 = vmatpush.msra.mxu0 0.0
        %1505 = vmatpush.msra.mxu0 0.0
        %1506 = vmatpush.msra.mxu0 0.0
        %1507 = vmatpush.msra.mxu0 0.0
        %1508 = vmatpush.msra.mxu0 0.0
        %1509 = vmatpush.msra.mxu0 %v1499
        %1510 = vmatpush.msra.mxu0 %v1497
        %1511 = vmatpush.msra.mxu0 %v1495
        %1512 = vmatpush.msra.mxu0 %v1493
        %1513 = vmatpush.msra.mxu0 %v1491
        %1514 = vmatpush.msra.mxu0 %v1489
        %1515 = vmatpush.msra.mxu0 %v1487
        %1516 = vmatpush.msra.mxu0 %v1485
        %1517 = vmatmul.f32.gmra.mxu0 %v1434
        %v1518 = vpop.f32.mrf.mxu0
        %v1519 = vadd.f32 0.0, %v1518
        %1520 = vmatmul.f32.gmra.mxu0 %v1437
        %v1521 = vpop.f32.mrf.mxu0
        %v1522 = vadd.f32 0.0, %v1521
        %1523 = vdwg.mxu0
        %1524 = vmatpush.msra.mxu0 0.0
        %1525 = vmatpush.msra.mxu0 0.0
        %1526 = vmatpush.msra.mxu0 0.0
        %1527 = vmatpush.msra.mxu0 0.0
        %1528 = vmatpush.msra.mxu0 0.0
        %1529 = vmatpush.msra.mxu0 0.0
        %1530 = vmatpush.msra.mxu0 0.0
        %1531 = vmatpush.msra.mxu0 0.0
        %1532 = vmatpush.msra.mxu0 %v1500
        %1533 = vmatpush.msra.mxu0 %v1498
        %1534 = vmatpush.msra.mxu0 %v1496
        %1535 = vmatpush.msra.mxu0 %v1494
        %1536 = vmatpush.msra.mxu0 %v1492
        %1537 = vmatpush.msra.mxu0 %v1490
        %1538 = vmatpush.msra.mxu0 %v1488
        %1539 = vmatpush.msra.mxu0 %v1486
        %1540 = vmatmul.f32.gmra.mxu0 %v1434
        %v1541 = vpop.f32.mrf.mxu0
        %v1542 = vadd.f32 0.0, %v1541
        %1543 = vmatmul.f32.gmra.mxu0 %v1437
        %v1544 = vpop.f32.mrf.mxu0
        %v1545 = vadd.f32 0.0, %v1544
        %1546 = vdwg.mxu0
        %v1548 = vsel %vm490, %v1395, 0
        %v1551 = vsel %vm490, %v1457, 0
        %v1554 = vsel %vm490, %v1460, 0
        %1556 = vmatpush.xpose.msra.mxu0 0.0
        %1557 = vmatpush.xpose.msra.mxu0 0.0
        %1558 = vmatpush.xpose.msra.mxu0 0.0
        %1559 = vmatpush.xpose.msra.mxu0 0.0
        %1560 = vmatpush.xpose.msra.mxu0 0.0
        %1561 = vmatpush.xpose.msra.mxu0 0.0
        %1562 = vmatpush.xpose.msra.mxu0 0.0
        %1563 = vmatpush.xpose.msra.mxu0 0.0
        %1564 = vmatpush.xpose.msra.mxu0 0.0
        %1565 = vmatpush.xpose.msra.mxu0 0.0
        %1566 = vmatpush.xpose.msra.mxu0 0.0
        %1567 = vmatpush.xpose.msra.mxu0 0.0
        %1568 = vmatpush.xpose.msra.mxu0 0.0
        %1569 = vmatpush.xpose.msra.mxu0 0.0
        %1570 = vmatpush.xpose.msra.mxu0 %v1554
        %1571 = vmatpush.xpose.msra.mxu0 %v1551
        %1572 = vmatmul.f32.gmra.mxu0 %v1548
        %v1573 = vpop.f32.mrf.mxu0
        %v1574 = vadd.f32 0.0, %v1573
        %1575 = vdwg.mxu0
        %v1576 = vmul.f32 %v1574, 0.125
        %v1577 = vadd.f32 %v1576, %v395
        %vm1578 = vcmask 130048
        %v1579 = vsel %vm1578, %v1577, -inf
        %1580 = vmax.xlane.f32.xlu0 %v1579
        %v1581 = vpop.xlane.xlu0 %1580
        %v1582 = vsub.f32 %v1577, %v1581
        %v1583 = vmul.f32 %v1582, 1.442695
        %v1584 = vpow.pop %v1583
        %v1585 = vsel %vm1578, %v1584, 0.0
        %1586 = vadd.xlane.f32.xlu0 %v1585
        %v1587 = vpop.xlane.xlu0 %1586
        %v1588 = vrcp.pop %v1587
        %v1589 = vmul.f32 %v1587, %v1588
        %v1590 = vsub.f32 1.0, %v1589
        %v1591 = vmul.f32 %v1588, %v1590
        %v1592 = vadd.f32 %v1588, %v1591
        %vm1593 = vweird.f32 %v1587
        %vm1594 = vweird.f32 %v1588
        %vm1595 = vmor %vm1593, %vm1594
        %v1596 = vsel %vm1595, %v1588, %v1592
        %v1597 = vand.u32 2147483647, %v1587
        %vm1598 = vcmp.eq.f32.partialorder %v1597, 8.507059e+37
        %v1599 = vand.u32 %v1587, 2147483648
        %v1600 = vor.u32 1.1754944e-38, %v1599
        %v1601 = vsel %vm1598, %v1600, %v1596
        %v1602 = vmul.f32 %v1584, %v1601
        %v1604 = vsel %vm1578, %v1602, 0
        %1606 = vmatpush.msra.mxu0 0.0
        %1607 = vmatpush.msra.mxu0 0.0
        %1608 = vmatpush.msra.mxu0 0.0
        %1609 = vmatpush.msra.mxu0 0.0
        %1610 = vmatpush.msra.mxu0 0.0
        %1611 = vmatpush.msra.mxu0 0.0
        %1612 = vmatpush.msra.mxu0 0.0
        %1613 = vmatpush.msra.mxu0 0.0
        %1614 = vmatpush.msra.mxu0 0.0
        %1615 = vmatpush.msra.mxu0 0.0
        %1616 = vmatpush.msra.mxu0 0.0
        %1617 = vmatpush.msra.mxu0 0.0
        %1618 = vmatpush.msra.mxu0 0.0
        %1619 = vmatpush.msra.mxu0 0.0
        %1620 = vmatpush.msra.mxu0 %v1522
        %1621 = vmatpush.msra.mxu0 %v1519
        %1622 = vmatmul.f32.gmra.mxu0 %v1604
        %v1623 = vpop.f32.mrf.mxu0
        %v1624 = vadd.f32 0.0, %v1623
        %1625 = vdwg.mxu0
        %1626 = vrot.lane.b32.xlu0 %v1395, 64
        %v1627 = vpop.permute.xlu0 %1626
        %1628 = vrot.lane.b32.xlu0 %v1457, 64
        %v1629 = vpop.permute.xlu0 %1628
        %1630 = vrot.lane.b32.xlu0 %v1460, 64
        %v1631 = vpop.permute.xlu0 %1630
        %v1632 = vsel %vm490, %v1627, 0
        %v1634 = vsel %vm490, %v1629, 0
        %v1636 = vsel %vm490, %v1631, 0
        %1638 = vmatpush.xpose.msra.mxu0 0.0
        %1639 = vmatpush.xpose.msra.mxu0 0.0
        %1640 = vmatpush.xpose.msra.mxu0 0.0
        %1641 = vmatpush.xpose.msra.mxu0 0.0
        %1642 = vmatpush.xpose.msra.mxu0 0.0
        %1643 = vmatpush.xpose.msra.mxu0 0.0
        %1644 = vmatpush.xpose.msra.mxu0 0.0
        %1645 = vmatpush.xpose.msra.mxu0 0.0
        %1646 = vmatpush.xpose.msra.mxu0 0.0
        %1647 = vmatpush.xpose.msra.mxu0 0.0
        %1648 = vmatpush.xpose.msra.mxu0 0.0
        %1649 = vmatpush.xpose.msra.mxu0 0.0
        %1650 = vmatpush.xpose.msra.mxu0 0.0
        %1651 = vmatpush.xpose.msra.mxu0 0.0
        %1652 = vmatpush.xpose.msra.mxu0 %v1636
        %1653 = vmatpush.xpose.msra.mxu0 %v1634
        %1654 = vmatmul.f32.gmra.mxu0 %v1632
        %v1655 = vpop.f32.mrf.mxu0
        %v1656 = vadd.f32 0.0, %v1655
        %1657 = vdwg.mxu0
        %v1658 = vmul.f32 %v1656, 0.125
        %v1659 = vadd.f32 %v1658, %v395
        %v1660 = vsel %vm1578, %v1659, -inf
        %1661 = vmax.xlane.f32.xlu0 %v1660
        %v1662 = vpop.xlane.xlu0 %1661
        %v1663 = vsub.f32 %v1659, %v1662
        %v1664 = vmul.f32 %v1663, 1.442695
        %v1665 = vpow.pop %v1664
        %v1666 = vsel %vm1578, %v1665, 0.0
        %1667 = vadd.xlane.f32.xlu0 %v1666
        %v1668 = vpop.xlane.xlu0 %1667
        %v1669 = vrcp.pop %v1668
        %v1670 = vmul.f32 %v1668, %v1669
        %v1671 = vsub.f32 1.0, %v1670
        %v1672 = vmul.f32 %v1669, %v1671
        %v1673 = vadd.f32 %v1669, %v1672
        %vm1674 = vweird.f32 %v1668
        %vm1675 = vweird.f32 %v1669
        %vm1676 = vmor %vm1674, %vm1675
        %v1677 = vsel %vm1676, %v1669, %v1673
        %v1678 = vand.u32 2147483647, %v1668
        %vm1679 = vcmp.eq.f32.partialorder %v1678, 8.507059e+37
        %v1680 = vand.u32 %v1668, 2147483648
        %v1681 = vor.u32 1.1754944e-38, %v1680
        %v1682 = vsel %vm1679, %v1681, %v1677
        %v1683 = vmul.f32 %v1665, %v1682
        %1686 = vrot.lane.b32.xlu0 %v1519, 64
        %v1687 = vpop.permute.xlu0 %1686
        %1688 = vrot.lane.b32.xlu0 %v1522, 64
        %v1689 = vpop.permute.xlu0 %1688
        %v1693 = vsel %vm1578, %v1683, 0
        %1695 = vmatpush.msra.mxu0 0.0
        %1696 = vmatpush.msra.mxu0 0.0
        %1697 = vmatpush.msra.mxu0 0.0
        %1698 = vmatpush.msra.mxu0 0.0
        %1699 = vmatpush.msra.mxu0 0.0
        %1700 = vmatpush.msra.mxu0 0.0
        %1701 = vmatpush.msra.mxu0 0.0
        %1702 = vmatpush.msra.mxu0 0.0
        %1703 = vmatpush.msra.mxu0 0.0
        %1704 = vmatpush.msra.mxu0 0.0
        %1705 = vmatpush.msra.mxu0 0.0
        %1706 = vmatpush.msra.mxu0 0.0
        %1707 = vmatpush.msra.mxu0 0.0
        %1708 = vmatpush.msra.mxu0 0.0
        %1709 = vmatpush.msra.mxu0 %v1689
        %1710 = vmatpush.msra.mxu0 %v1687
        %1711 = vmatmul.f32.gmra.mxu0 %v1693
        %v1712 = vpop.f32.mrf.mxu0
        %v1713 = vadd.f32 0.0, %v1712
        %1714 = vdwg.mxu0
        %v1716 = vsel %vm490, %v1415, 0
        %v1719 = vsel %vm490, %v1480, 0
        %v1722 = vsel %vm490, %v1483, 0
        %1724 = vmatpush.xpose.msra.mxu0 0.0
        %1725 = vmatpush.xpose.msra.mxu0 0.0
        %1726 = vmatpush.xpose.msra.mxu0 0.0
        %1727 = vmatpush.xpose.msra.mxu0 0.0
        %1728 = vmatpush.xpose.msra.mxu0 0.0
        %1729 = vmatpush.xpose.msra.mxu0 0.0
        %1730 = vmatpush.xpose.msra.mxu0 0.0
        %1731 = vmatpush.xpose.msra.mxu0 0.0
        %1732 = vmatpush.xpose.msra.mxu0 0.0
        %1733 = vmatpush.xpose.msra.mxu0 0.0
        %1734 = vmatpush.xpose.msra.mxu0 0.0
        %1735 = vmatpush.xpose.msra.mxu0 0.0
        %1736 = vmatpush.xpose.msra.mxu0 0.0
        %1737 = vmatpush.xpose.msra.mxu0 0.0
        %1738 = vmatpush.xpose.msra.mxu0 %v1722
        %1739 = vmatpush.xpose.msra.mxu0 %v1719
        %1740 = vmatmul.f32.gmra.mxu0 %v1716
        %v1741 = vpop.f32.mrf.mxu0
        %v1742 = vadd.f32 0.0, %v1741
        %1743 = vdwg.mxu0
        %v1744 = vmul.f32 %v1742, 0.125
        %v1745 = vadd.f32 %v1744, %v395
        %v1746 = vsel %vm1578, %v1745, -inf
        %1747 = vmax.xlane.f32.xlu0 %v1746
        %v1748 = vpop.xlane.xlu0 %1747
        %v1749 = vsub.f32 %v1745, %v1748
        %v1750 = vmul.f32 %v1749, 1.442695
        %v1751 = vpow.pop %v1750
        %v1752 = vsel %vm1578, %v1751, 0.0
        %1753 = vadd.xlane.f32.xlu0 %v1752
        %v1754 = vpop.xlane.xlu0 %1753
        %v1755 = vrcp.pop %v1754
        %v1756 = vmul.f32 %v1754, %v1755
        %v1757 = vsub.f32 1.0, %v1756
        %v1758 = vmul.f32 %v1755, %v1757
        %v1759 = vadd.f32 %v1755, %v1758
        %vm1760 = vweird.f32 %v1754
        %vm1761 = vweird.f32 %v1755
        %vm1762 = vmor %vm1760, %vm1761
        %v1763 = vsel %vm1762, %v1755, %v1759
        %v1764 = vand.u32 2147483647, %v1754
        %vm1765 = vcmp.eq.f32.partialorder %v1764, 8.507059e+37
        %v1766 = vand.u32 %v1754, 2147483648
        %v1767 = vor.u32 1.1754944e-38, %v1766
        %v1768 = vsel %vm1765, %v1767, %v1763
        %v1769 = vmul.f32 %v1751, %v1768
        %v1771 = vsel %vm1578, %v1769, 0
        %1773 = vmatpush.msra.mxu0 0.0
        %1774 = vmatpush.msra.mxu0 0.0
        %1775 = vmatpush.msra.mxu0 0.0
        %1776 = vmatpush.msra.mxu0 0.0
        %1777 = vmatpush.msra.mxu0 0.0
        %1778 = vmatpush.msra.mxu0 0.0
        %1779 = vmatpush.msra.mxu0 0.0
        %1780 = vmatpush.msra.mxu0 0.0
        %1781 = vmatpush.msra.mxu0 0.0
        %1782 = vmatpush.msra.mxu0 0.0
        %1783 = vmatpush.msra.mxu0 0.0
        %1784 = vmatpush.msra.mxu0 0.0
        %1785 = vmatpush.msra.mxu0 0.0
        %1786 = vmatpush.msra.mxu0 0.0
        %1787 = vmatpush.msra.mxu0 %v1545
        %1788 = vmatpush.msra.mxu0 %v1542
        %1789 = vmatmul.f32.gmra.mxu0 %v1771
        %v1790 = vpop.f32.mrf.mxu0
        %v1791 = vadd.f32 0.0, %v1790
        %1792 = vdwg.mxu0
        %1793 = vrot.lane.b32.xlu0 %v1415, 64
        %v1794 = vpop.permute.xlu0 %1793
        %1795 = vrot.lane.b32.xlu0 %v1480, 64
        %v1796 = vpop.permute.xlu0 %1795
        %1797 = vrot.lane.b32.xlu0 %v1483, 64
        %v1798 = vpop.permute.xlu0 %1797
        %v1799 = vsel %vm490, %v1794, 0
        %v1801 = vsel %vm490, %v1796, 0
        %v1803 = vsel %vm490, %v1798, 0
        %1805 = vmatpush.xpose.msra.mxu0 0.0
        %1806 = vmatpush.xpose.msra.mxu0 0.0
        %1807 = vmatpush.xpose.msra.mxu0 0.0
        %1808 = vmatpush.xpose.msra.mxu0 0.0
        %1809 = vmatpush.xpose.msra.mxu0 0.0
        %1810 = vmatpush.xpose.msra.mxu0 0.0
        %1811 = vmatpush.xpose.msra.mxu0 0.0
        %1812 = vmatpush.xpose.msra.mxu0 0.0
        %1813 = vmatpush.xpose.msra.mxu0 0.0
        %1814 = vmatpush.xpose.msra.mxu0 0.0
        %1815 = vmatpush.xpose.msra.mxu0 0.0
        %1816 = vmatpush.xpose.msra.mxu0 0.0
        %1817 = vmatpush.xpose.msra.mxu0 0.0
        %1818 = vmatpush.xpose.msra.mxu0 0.0
        %1819 = vmatpush.xpose.msra.mxu0 %v1803
        %1820 = vmatpush.xpose.msra.mxu0 %v1801
        %1821 = vmatmul.f32.gmra.mxu0 %v1799
        %v1822 = vpop.f32.mrf.mxu0
        %v1823 = vadd.f32 0.0, %v1822
        %1824 = vdwg.mxu0
        %v1825 = vmul.f32 %v1823, 0.125
        %v1826 = vadd.f32 %v1825, %v395
        %v1827 = vsel %vm1578, %v1826, -inf
        %1828 = vmax.xlane.f32.xlu0 %v1827
        %v1829 = vpop.xlane.xlu0 %1828
        %v1830 = vsub.f32 %v1826, %v1829
        %v1831 = vmul.f32 %v1830, 1.442695
        %v1832 = vpow.pop %v1831
        %v1833 = vsel %vm1578, %v1832, 0.0
        %1834 = vadd.xlane.f32.xlu0 %v1833
        %v1835 = vpop.xlane.xlu0 %1834
        %v1836 = vrcp.pop %v1835
        %v1837 = vmul.f32 %v1835, %v1836
        %v1838 = vsub.f32 1.0, %v1837
        %v1839 = vmul.f32 %v1836, %v1838
        %v1840 = vadd.f32 %v1836, %v1839
        %vm1841 = vweird.f32 %v1835
        %vm1842 = vweird.f32 %v1836
        %vm1843 = vmor %vm1841, %vm1842
        %v1844 = vsel %vm1843, %v1836, %v1840
        %v1845 = vand.u32 2147483647, %v1835
        %vm1846 = vcmp.eq.f32.partialorder %v1845, 8.507059e+37
        %v1847 = vand.u32 %v1835, 2147483648
        %v1848 = vor.u32 1.1754944e-38, %v1847
        %v1849 = vsel %vm1846, %v1848, %v1844
        %v1850 = vmul.f32 %v1832, %v1849
        %1853 = vrot.lane.b32.xlu0 %v1542, 64
        %v1854 = vpop.permute.xlu0 %1853
        %1855 = vrot.lane.b32.xlu0 %v1545, 64
        %v1856 = vpop.permute.xlu0 %1855
        %v1860 = vsel %vm1578, %v1850, 0
        %1862 = vmatpush.msra.mxu0 0.0
        %1863 = vmatpush.msra.mxu0 0.0
        %1864 = vmatpush.msra.mxu0 0.0
        %1865 = vmatpush.msra.mxu0 0.0
        %1866 = vmatpush.msra.mxu0 0.0
        %1867 = vmatpush.msra.mxu0 0.0
        %1868 = vmatpush.msra.mxu0 0.0
        %1869 = vmatpush.msra.mxu0 0.0
        %1870 = vmatpush.msra.mxu0 0.0
        %1871 = vmatpush.msra.mxu0 0.0
        %1872 = vmatpush.msra.mxu0 0.0
        %1873 = vmatpush.msra.mxu0 0.0
        %1874 = vmatpush.msra.mxu0 0.0
        %1875 = vmatpush.msra.mxu0 0.0
        %1876 = vmatpush.msra.mxu0 %v1856
        %1877 = vmatpush.msra.mxu0 %v1854
        %1878 = vmatmul.f32.gmra.mxu0 %v1860
        %v1879 = vpop.f32.mrf.mxu0
        %v1880 = vadd.f32 0.0, %v1879
        %1881 = vdwg.mxu0
        %1883 = vrot.lane.b32.xlu0 %v1713, 64
        %v1884 = vpop.permute.xlu0 %1883
        %1887 = vrot.lane.b32.xlu0 %v1880, 64
        %v1888 = vpop.permute.xlu0 %1887
        %v1890 = vsel %vm490, %v1624, %v1884
        %v1891 = vsel %vm490, %v1791, %v1888
        %v1892 = vld [vmem:[%s9] sm:$0xff]
        %v1893 = vld [vmem:[%s9 + $0x8] sm:$0xff]
        %v1894 = vld [vmem:[%s9 + $0x10] sm:$0xff]
        %v1895 = vld [vmem:[%s9 + $0x18] sm:$0xff]
        %v1896 = vld [vmem:[%s9 + $0x20] sm:$0xff]
        %v1897 = vld [vmem:[%s9 + $0x28] sm:$0xff]
        %v1898 = vld [vmem:[%s9 + $0x30] sm:$0xff]
        %v1899 = vld [vmem:[%s9 + $0x38] sm:$0xff]
        %v1900 = vld [vmem:[%s9 + $0x40] sm:$0xff]
        %v1901 = vld [vmem:[%s9 + $0x48] sm:$0xff]
        %v1902 = vld [vmem:[%s9 + $0x50] sm:$0xff]
        %v1903 = vld [vmem:[%s9 + $0x58] sm:$0xff]
        %v1904 = vld [vmem:[%s9 + $0x60] sm:$0xff]
        %v1905 = vld [vmem:[%s9 + $0x68] sm:$0xff]
        %v1906 = vld [vmem:[%s9 + $0x70] sm:$0xff]
        %v1907 = vld [vmem:[%s9 + $0x78] sm:$0xff]
        %v1908 = vld [vmem:[%s9 + $0x80] sm:$0xff]
        %v1909 = vld [vmem:[%s9 + $0x88] sm:$0xff]
        %v1910 = vld [vmem:[%s9 + $0x90] sm:$0xff]
        %v1911 = vld [vmem:[%s9 + $0x98] sm:$0xff]
        %v1912 = vld [vmem:[%s9 + $0xa0] sm:$0xff]
        %v1913 = vld [vmem:[%s9 + $0xa8] sm:$0xff]
        %v1914 = vld [vmem:[%s9 + $0xb0] sm:$0xff]
        %v1915 = vld [vmem:[%s9 + $0xb8] sm:$0xff]
        %v1916 = vld [vmem:[%s9 + $0xc0] sm:$0xff]
        %v1917 = vld [vmem:[%s9 + $0xc8] sm:$0xff]
        %v1918 = vld [vmem:[%s9 + $0xd0] sm:$0xff]
        %v1919 = vld [vmem:[%s9 + $0xd8] sm:$0xff]
        %v1920 = vld [vmem:[%s9 + $0xe0] sm:$0xff]
        %v1921 = vld [vmem:[%s9 + $0xe8] sm:$0xff]
        %v1922 = vld [vmem:[%s9 + $0xf0] sm:$0xff]
        %v1923 = vld [vmem:[%s9 + $0xf8] sm:$0xff]
        %1924 = vmatpush.msra.mxu0 %v1907
        %1925 = vmatpush.msra.mxu0 %v1906
        %1926 = vmatpush.msra.mxu0 %v1905
        %1927 = vmatpush.msra.mxu0 %v1904
        %1928 = vmatpush.msra.mxu0 %v1903
        %1929 = vmatpush.msra.mxu0 %v1902
        %1930 = vmatpush.msra.mxu0 %v1901
        %1931 = vmatpush.msra.mxu0 %v1900
        %1932 = vmatpush.msra.mxu0 %v1899
        %1933 = vmatpush.msra.mxu0 %v1898
        %1934 = vmatpush.msra.mxu0 %v1897
        %1935 = vmatpush.msra.mxu0 %v1896
        %1936 = vmatpush.msra.mxu0 %v1895
        %1937 = vmatpush.msra.mxu0 %v1894
        %1938 = vmatpush.msra.mxu0 %v1893
        %1939 = vmatpush.msra.mxu0 %v1892
        %1940 = vmatmul.f32.gmra.mxu0 %v1890
        %v1941 = vpop.f32.mrf.mxu0
        %v1942 = vadd.f32 0.0, %v1941
        %1943 = vdwg.mxu0
        %1944 = vmatpush.msra.mxu0 %v1923
        %1945 = vmatpush.msra.mxu0 %v1922
        %1946 = vmatpush.msra.mxu0 %v1921
        %1947 = vmatpush.msra.mxu0 %v1920
        %1948 = vmatpush.msra.mxu0 %v1919
        %1949 = vmatpush.msra.mxu0 %v1918
        %1950 = vmatpush.msra.mxu0 %v1917
        %1951 = vmatpush.msra.mxu0 %v1916
        %1952 = vmatpush.msra.mxu0 %v1915
        %1953 = vmatpush.msra.mxu0 %v1914
        %1954 = vmatpush.msra.mxu0 %v1913
        %1955 = vmatpush.msra.mxu0 %v1912
        %1956 = vmatpush.msra.mxu0 %v1911
        %1957 = vmatpush.msra.mxu0 %v1910
        %1958 = vmatpush.msra.mxu0 %v1909
        %1959 = vmatpush.msra.mxu0 %v1908
        %1960 = vmatmul.f32.gmra.mxu0 %v1891
        %v1961 = vpop.f32.mrf.mxu0
        %v1962 = vadd.f32 %v1942, %v1961
        %1963 = vdwg.mxu0
        %v1964 = vsub.f32 0.0, %v1962
        %v1965 = vmul.f32 %v1964, 1.442695
        %v1966 = vpow.pop %v1965
        %v1967 = vmul.f32 %v1357, %v1966
        %1968 = vst.msk [vmem:[%s378] sm:$0xff] %vm490, %v1967
        %s1969 = sand.u32 %s257, 1
        %s1970 = scalar_lea.sflag [#allocation4], %s1969
        %s1971 = sand.u32 %s257, 1
        %s1972 = smul.addr %s1971, 8
        %s1973 = scalar_lea.vmem [#allocation3], %s1972
        // Predicated region
        $region61: #{short_term_encoder.1} parent=59 // pred_check
          %p1974 = pneg %p267
        $region62: #{short_term_encoder.1} parent=59 // pred_check_branch
          %1976 = sbr.rel (%p1974) target = $region64
        $region63: #{short_term_encoder.1} parent=59 // pred_region
          %1978 = vsyncadd %s1970, 0
          %s1979 = smul.addr %s24, 8
          %s1980 = scalar_lea.hbm %s10, %s1979
          %s1982 = sshll.u32 %s1973, 4
          %s1983 = int_to_ptr.vmem [resolvable:$true] %s1982
          %s1984 = sshll.u32 %s1980, 4
          %s1985 = int_to_ptr.hbm [resolvable:$true] %s1984
          %1987 = dma.vmem_to_hbm [thread:$0]  %s1983, 128, %s1985, %s1970
        $region64: #{short_term_encoder.1} parent=59 // pred_fallthru
          _
      $region60: #{short_term_encoder.1} parent=5 // pred_fallthru
        _
      %p1988 = scmp.le.s32.totalorder 2, %s19
      // Predicated region
      $region65: #{short_term_encoder.1} parent=5 // pred_check
        %p1989 = pneg %p1988
      $region66: #{short_term_encoder.1} parent=5 // pred_check_branch
        %1991 = sbr.rel (%p1989) target = $region68
      $region67: #{short_term_encoder.1} parent=5 // pred_region
        %s1992 = ssub.s32 %s19, 2
        // Predicated region
        $region69: #{short_term_encoder.1} parent=67 // pred_check
          %p1993 = pneg %p273
        $region70: #{short_term_encoder.1} parent=67 // pred_check_branch
          %1995 = sbr.rel (%p1993) target = $region72
        $region71: #{short_term_encoder.1} parent=67 // pred_region
          %s1996 = sand.u32 %s258, 1
          %s1997 = scalar_lea.sflag [#allocation4], %s1996
          %s1998 = sand.u32 %s258, 1
          %s1999 = smul.addr %s1998, 8
          %s2000 = scalar_lea.vmem [#allocation3], %s1999
          %2002 = dma.done %s1997, 128
        $region72: #{short_term_encoder.1} parent=67 // pred_fallthru
          _
      $region68: #{short_term_encoder.1} parent=5 // pred_fallthru
        _
    $region6: #{short_term_encoder.1} parent=1 // loop_footer
      %s23 = sadd.s32 1, %s19
    $region7: #{short_term_encoder.1} parent=1 // loop_footer_branch
      %18 = sbr.rel target = $region3
    $region8: #{short_term_encoder.1} parent=1 // loop_exit
      _
    %2003 = vsyncpa [#allocation4], 1
    %s2004 = scalar_lea.sflag [#allocation4], 1
    %2005 = vsyncpa %s2004, 1

</llo_original>
